<compile_context>
chip_gen: v7x
topology: tpu7x:2x2x1
jax: 0.10.0
libtpu: 0.0.40
codegen_flags: <defaults>
</compile_context>

<pallas_src>
import functools

import numpy as np
import jax
import jax.numpy as jnp
from jax.experimental import pallas as pl
from jax.experimental.pallas import tpu as pltpu


def _round_up(x, m):
    return (x + m - 1) // m * m


def _auto_row_tile(H, W, B, cap=2048):
    """Largest row tile dividing H with th*W <= cap output positions per grid
    step; prefers >= 2 total grid steps so v7x's second TensorCore has work."""
    cands = [t for t in range(1, H + 1)
             if H % t == 0 and (t % 8 == 0 or t == H)]
    small = [t for t in cands if t * W <= cap]
    th = max(small) if small else min(cands)
    if B * (H // th) < 2:
        multi = [t for t in small if H // t >= 2]
        if multi:
            th = max(multi)
    return th


# ----------------------------------------------------------------------------
# Pallas kernel: fused KxK conv (stride 1, same pad) + folded BN + ReLU6
# ----------------------------------------------------------------------------
def _conv_bn_relu6_kernel(xt_ref, w_ref, scale_ref, shift_ref, o_ref, *, relu6):
    # xt_ref:    (row_tile + KH, Wp, Cin)  bf16  pre-padded input band (halo rows)
    # w_ref:     (KH, KW, Cin, Cout)       bf16  HWIO conv weight
    # scale_ref: (1, Cout)                 f32   folded BN scale  gamma/sqrt(var+eps)
    # shift_ref: (1, Cout)                 f32   folded BN shift  beta - mean*scale
    # o_ref:     (row_tile, W, Cout)       f32   output band (NHWC)
    rows, wp, cin = xt_ref.shape
    kh_total, kw_total, _, cout = w_ref.shape
    th, out_w, _ = o_ref.shape
    m = th * wp                          # full-width output rows per band

    # ONE contiguous collapse of the band (Wp % 8 == 0 -> sublane aligned).
    # Every conv tap below is just a static row-shifted slice of this slab:
    # no per-tap W-gather / reshape relayouts.
    slab = xt_ref[...].reshape(rows * wp, cin)

    acc = None
    for kh in range(kh_total):
        for kw in range(kw_total):
            off = kh * wp + kw
            tap = jnp.dot(slab[off:off + m, :], w_ref[kh, kw],
                          preferred_element_type=jnp.float32)
            acc = tap if acc is None else acc + tap

    y = acc * scale_ref[...] + shift_ref[...]      # folded eval-mode BatchNorm
    if relu6:
        y = jnp.clip(y, 0.0, 6.0)                  # nn.ReLU6
    # Rows are (t, w) pairs at stride Wp; columns w >= out_w only ever received
    # padding / row-wrap contributions and are dropped here.
    y = y.reshape(th, wp, cout)[:, :out_w, :]
    o_ref[...] = y.astype(o_ref.dtype)


def conv_bn_relu6(x_nchw, w_oihw, bn_gamma, bn_beta, bn_mean, bn_var, *,
                  eps=1e-3, relu6=True, row_tile=None,
                  compute_dtype=jnp.bfloat16):
    """Fused Conv2d(bias=False, stride=1, pad=k//2) + eval BatchNorm + ReLU6.

    x_nchw: (B, Cin, H, W). w_oihw: (Cout, Cin, KH, KW) (PyTorch layouts).
    Returns (B, Cout, H, W) float32, matching the PyTorch module's output.
    """
    B, Cin, H, W = x_nchw.shape
    Cout, Cin_w, KH, KW = w_oihw.shape
    if Cin_w != Cin:
        # TODO(synk): depthwise (groups=in_planes) path not implemented.
        raise NotImplementedError("grouped/depthwise conv not implemented")
    if KH % 2 != 1 or KW % 2 != 1:
        raise NotImplementedError("even kernel sizes not implemented")
    ph, pw = KH // 2, KW // 2

    th = _auto_row_tile(H, W, B) if row_tile is None else row_tile
    assert H % th == 0, "row_tile must divide H"
    assert th % 8 == 0 or th == H, "row_tile must be a multiple of 8 (or == H)"
    nh = H // th

    # Padded width: conv 'same' padding plus right padding to a multiple of 8
    # so the in-kernel (rows, Wp, Cin) -> (rows*Wp, Cin) collapse is contiguous.
    Wp = _round_up(W + KW - 1, 8)

    # Boundary layout plumbing (fused by XLA into one producer pass under jit):
    # NCHW -> NHWC, zero pad, bf16 cast, overlapping row-band extraction.
    x = jnp.transpose(x_nchw, (0, 2, 3, 1))
    xp = jnp.pad(x, ((0, 0), (ph, KH - ph), (pw, Wp - W - pw), (0, 0)))
    xp = xp.astype(compute_dtype)
    # (B, nh, th + KH, Wp, Cin): band h holds padded rows [h*th, h*th + th + KH)
    # (KH halo rows, incl. one spare row covering the in-band kw row shifts).
    xt = jnp.stack([xp[:, h * th: h * th + th + KH] for h in range(nh)], axis=1)

    w = jnp.transpose(w_oihw, (2, 3, 1, 0)).astype(compute_dtype)   # HWIO

    # Fold eval-mode BatchNorm (conv bias=False) into per-channel scale/shift.
    scale = bn_gamma.astype(jnp.float32) * jax.lax.rsqrt(
        bn_var.astype(jnp.float32) + jnp.float32(eps))
    shift = bn_beta.astype(jnp.float32) - bn_mean.astype(jnp.float32) * scale
    scale = scale.reshape(1, Cout)
    shift = shift.reshape(1, Cout)

    # VMEM budget derived from the actual block shapes (double buffered) plus
    # kernel temporaries, clamped so the tiling also fits v7x's 64 MiB VMEM.
    isz = np.dtype(compute_dtype).itemsize
    block_bytes = ((th + KH) * Wp * Cin * isz          # input band
                   + KH * KW * Cin * Cout * isz        # weights
                   + 2 * Cout * 4                      # scale + shift
                   + th * W * Cout * 4)                # output band
    temp_bytes = (3 * th * Wp * Cout * 4               # f32 accumulator + epilogue
                  + 2 * (th + KH) * Wp * Cin * isz)    # collapsed slab + tap operand
    vmem_limit = int(min(48 << 20,
                         max(16 << 20, 2 * block_bytes + temp_bytes + (2 << 20))))

    out_nhwc = pl.pallas_call(
        functools.partial(_conv_bn_relu6_kernel, relu6=relu6),
        out_shape=jax.ShapeDtypeStruct((B, H, W, Cout), jnp.float32),
        grid=(B, nh),
        in_specs=[
            pl.BlockSpec((None, None, th + KH, Wp, Cin),
                         lambda b, h: (b, h, 0, 0, 0)),
            pl.BlockSpec((KH, KW, Cin, Cout), lambda b, h: (0, 0, 0, 0)),
            pl.BlockSpec((1, Cout), lambda b, h: (0, 0)),
            pl.BlockSpec((1, Cout), lambda b, h: (0, 0)),
        ],
        out_specs=pl.BlockSpec((None, th, W, Cout), lambda b, h: (b, h, 0, 0)),
        compiler_params=pltpu.CompilerParams(
            dimension_semantics=("parallel", "parallel"),
            vmem_limit_bytes=vmem_limit),
    )(xt, w, scale, shift)

    # NHWC -> NCHW (PyTorch layout).
    return jnp.transpose(out_nhwc, (0, 3, 1, 2))


_conv_bn_relu6_jit = jax.jit(
    conv_bn_relu6, static_argnames=("relu6", "row_tile", "compute_dtype"))


# ----------------------------------------------------------------------------
# Module mirror (eval mode), parameters initialized deterministically
# ----------------------------------------------------------------------------
class ConvBNReLUPallas:
    BN_EPS = 1e-3  # matches _bn(eps=0.001)

    def __init__(self, in_planes, out_planes, kernel_size=3, stride=1,
                 groups=1, key=None):
        if stride != 1:
            raise NotImplementedError("stride != 1 not implemented")  # TODO(synk)
        if groups != 1:
            # TODO(synk): depthwise (groups=in_planes) branch not implemented.
            raise NotImplementedError("grouped conv not implemented")
        self.in_planes = in_planes
        self.out_planes = out_planes
        self.kernel_size = kernel_size

        key = jax.random.PRNGKey(0) if key is None else key
        ks = jax.random.split(key, 5)
        n = lambda k, shape, s=0.1: s * jax.random.normal(k, shape, jnp.float32)

        # Conv2d(bias=False) weight, OIHW like PyTorch.
        self.conv_w = n(ks[0], (out_planes, in_planes, kernel_size, kernel_size))
        # BatchNorm2d parameters + running stats (eval mode).
        self.bn_gamma = 1.0 + n(ks[1], (out_planes,))
        self.bn_beta = n(ks[2], (out_planes,))
        self.bn_mean = n(ks[3], (out_planes,))
        self.bn_var = jnp.abs(1.0 + n(ks[4], (out_planes,))) + 0.01

    def __call__(self, x_nchw, *, row_tile=None):
        return _conv_bn_relu6_jit(
            x_nchw, self.conv_w, self.bn_gamma, self.bn_beta, self.bn_mean,
            self.bn_var, eps=self.BN_EPS, relu6=True, row_tile=row_tile)


if __name__ == "__main__":
    key = jax.random.PRNGKey(0)
    k_x, k_p = jax.random.split(key)

    batch, in_planes, out_planes, hw = 2, 32, 64, 16
    x = jax.random.normal(k_x, (batch, in_planes, hw, hw), jnp.float32)
    module = ConvBNReLUPallas(in_planes, out_planes, kernel_size=3, key=k_p)

    # Exercise the spatial (halo) tiling path: grid = (2 batches, 2 row bands).
    out = module(x, row_tile=8)
    jax.block_until_ready(out)
    assert out.shape == (batch, out_planes, hw, hw), out.shape

    # Pure-JAX (XLA) references.
    def reference(xf, wf):
        y = jax.lax.conv_general_dilated(
            xf, wf, window_strides=(1, 1), padding=((1, 1), (1, 1)),
            dimension_numbers=("NCHW", "OIHW", "NCHW"),
            precision=jax.lax.Precision.HIGHEST)
        scale = module.bn_gamma / jnp.sqrt(module.bn_var + module.BN_EPS)
        shift = module.bn_beta - module.bn_mean * scale
        y = y * scale[None, :, None, None] + shift[None, :, None, None]
        return jnp.clip(y, 0.0, 6.0)

    # Strict check vs a reference using the same bf16-quantized operands
    # (the kernel accumulates in f32, so this must match tightly).
    ref_bf16 = reference(x.astype(jnp.bfloat16).astype(jnp.float32),
                         module.conv_w.astype(jnp.bfloat16).astype(jnp.float32))
    err = float(jnp.max(jnp.abs(out - ref_bf16)))
    assert err < 1e-2, f"max abs error vs bf16-operand reference: {err}"

    # Loose check vs the full-f32 PyTorch-semantics reference (bf16 inputs).
    ref_f32 = reference(x, module.conv_w)
    err32 = float(jnp.max(jnp.abs(out - ref_f32)))
    assert err32 < 1.5e-1, f"max abs error vs f32 reference: {err32}"

    # Default (auto-tiled) path should also run and agree.
    out2 = module(x)
    jax.block_until_ready(out2)
    err2 = float(jnp.max(jnp.abs(out2 - ref_bf16)))
    assert err2 < 1e-2, f"max abs error (auto tile) vs bf16-operand reference: {err2}"

    print("KERNEL_OK")
</pallas_src>

<mosaic_0001>
module attributes {stable_mosaic.version = 11 : i64} {
  func.func @_conv_bn_relu6_kernel(%arg0: i32, %arg1: i32, %arg2: memref<1x1x11x24x32xbf16, #tpu.memory_space<vmem>>, %arg3: memref<3x3x32x64xbf16, #tpu.memory_space<vmem>>, %arg4: memref<1x64xf32, #tpu.memory_space<vmem>>, %arg5: memref<1x64xf32, #tpu.memory_space<vmem>>, %arg6: memref<1x8x16x64xf32, #tpu.memory_space<vmem>>) attributes {dimension_semantics = [#tpu.dimension_semantics<parallel>, #tpu.dimension_semantics<parallel>], iteration_bounds = array<i64: 2, 2>, scalar_prefetch = 0 : i64, scratch_operands = 0 : i64, tpu.core_type = #tpu.core_type<tc>, window_params = [{transform_indices = @transform_0, window_bounds = array<i64: 1, 1, 11, 24, 32>}, {pipeline_mode = #tpu.pipeline_mode<synchronous>, transform_indices = @transform_1, window_bounds = array<i64: 3, 3, 32, 64>}, {pipeline_mode = #tpu.pipeline_mode<synchronous>, transform_indices = @transform_2, window_bounds = array<i64: 1, 64>}, {pipeline_mode = #tpu.pipeline_mode<synchronous>, transform_indices = @transform_3, window_bounds = array<i64: 1, 64>}, {transform_indices = @transform_4, window_bounds = array<i64: 1, 8, 16, 64>}]} {
    %c0 = arith.constant 0 : index
    %c0_0 = arith.constant 0 : index
    %c0_1 = arith.constant 0 : index
    %c0_2 = arith.constant 0 : index
    %c0_3 = arith.constant 0 : index
    %0 = vector.load %arg2[%c0, %c0_0, %c0_1, %c0_2, %c0_3] : memref<1x1x11x24x32xbf16, #tpu.memory_space<vmem>>, vector<1x1x11x24x32xbf16>
    %1 = vector.shape_cast %0 : vector<1x1x11x24x32xbf16> to vector<11x24x32xbf16>
    %2 = vector.shape_cast %1 : vector<11x24x32xbf16> to vector<264x32xbf16>
    %3 = vector.extract_strided_slice %2 {offsets = [0, 0], sizes = [192, 32], strides = [1, 1]} : vector<264x32xbf16> to vector<192x32xbf16>
    %c0_4 = arith.constant 0 : index
    %c0_5 = arith.constant 0 : index
    %c0_6 = arith.constant 0 : index
    %c0_7 = arith.constant 0 : index
    %4 = vector.load %arg3[%c0_4, %c0_5, %c0_6, %c0_7] : memref<3x3x32x64xbf16, #tpu.memory_space<vmem>>, vector<1x1x32x64xbf16>
    %5 = vector.shape_cast %4 : vector<1x1x32x64xbf16> to vector<32x64xbf16>
    %cst = arith.constant dense<0.000000e+00> : vector<192x64xf32>
    %6 = tpu.matmul %3, %5, %cst {dimension_numbers = #tpu.dot_dimension_numbers<[1], [0], [0], [1], [0, 0, 1, 1], [], []>} : vector<192x32xbf16>, vector<32x64xbf16>, vector<192x64xf32> -> vector<192x64xf32>
    %7 = vector.extract_strided_slice %2 {offsets = [1, 0], sizes = [192, 32], strides = [1, 1]} : vector<264x32xbf16> to vector<192x32xbf16>
    %c0_8 = arith.constant 0 : index
    %c1 = arith.constant 1 : index
    %c0_9 = arith.constant 0 : index
    %c0_10 = arith.constant 0 : index
    %8 = vector.load %arg3[%c0_8, %c1, %c0_9, %c0_10] : memref<3x3x32x64xbf16, #tpu.memory_space<vmem>>, vector<1x1x32x64xbf16>
    %9 = vector.shape_cast %8 : vector<1x1x32x64xbf16> to vector<32x64xbf16>
    %cst_11 = arith.constant dense<0.000000e+00> : vector<192x64xf32>
    %10 = tpu.matmul %7, %9, %cst_11 {dimension_numbers = #tpu.dot_dimension_numbers<[1], [0], [0], [1], [0, 0, 1, 1], [], []>} : vector<192x32xbf16>, vector<32x64xbf16>, vector<192x64xf32> -> vector<192x64xf32>
    %11 = arith.addf %6, %10 : vector<192x64xf32>
    %12 = vector.extract_strided_slice %2 {offsets = [2, 0], sizes = [192, 32], strides = [1, 1]} : vector<264x32xbf16> to vector<192x32xbf16>
    %c0_12 = arith.constant 0 : index
    %c2 = arith.constant 2 : index
    %c0_13 = arith.constant 0 : index
    %c0_14 = arith.constant 0 : index
    %13 = vector.load %arg3[%c0_12, %c2, %c0_13, %c0_14] : memref<3x3x32x64xbf16, #tpu.memory_space<vmem>>, vector<1x1x32x64xbf16>
    %14 = vector.shape_cast %13 : vector<1x1x32x64xbf16> to vector<32x64xbf16>
    %cst_15 = arith.constant dense<0.000000e+00> : vector<192x64xf32>
    %15 = tpu.matmul %12, %14, %cst_15 {dimension_numbers = #tpu.dot_dimension_numbers<[1], [0], [0], [1], [0, 0, 1, 1], [], []>} : vector<192x32xbf16>, vector<32x64xbf16>, vector<192x64xf32> -> vector<192x64xf32>
    %16 = arith.addf %11, %15 : vector<192x64xf32>
    %17 = vector.extract_strided_slice %2 {offsets = [24, 0], sizes = [192, 32], strides = [1, 1]} : vector<264x32xbf16> to vector<192x32xbf16>
    %c1_16 = arith.constant 1 : index
    %c0_17 = arith.constant 0 : index
    %c0_18 = arith.constant 0 : index
    %c0_19 = arith.constant 0 : index
    %18 = vector.load %arg3[%c1_16, %c0_17, %c0_18, %c0_19] : memref<3x3x32x64xbf16, #tpu.memory_space<vmem>>, vector<1x1x32x64xbf16>
    %19 = vector.shape_cast %18 : vector<1x1x32x64xbf16> to vector<32x64xbf16>
    %cst_20 = arith.constant dense<0.000000e+00> : vector<192x64xf32>
    %20 = tpu.matmul %17, %19, %cst_20 {dimension_numbers = #tpu.dot_dimension_numbers<[1], [0], [0], [1], [0, 0, 1, 1], [], []>} : vector<192x32xbf16>, vector<32x64xbf16>, vector<192x64xf32> -> vector<192x64xf32>
    %21 = arith.addf %16, %20 : vector<192x64xf32>
    %22 = vector.extract_strided_slice %2 {offsets = [25, 0], sizes = [192, 32], strides = [1, 1]} : vector<264x32xbf16> to vector<192x32xbf16>
    %c1_21 = arith.constant 1 : index
    %c1_22 = arith.constant 1 : index
    %c0_23 = arith.constant 0 : index
    %c0_24 = arith.constant 0 : index
    %23 = vector.load %arg3[%c1_21, %c1_22, %c0_23, %c0_24] : memref<3x3x32x64xbf16, #tpu.memory_space<vmem>>, vector<1x1x32x64xbf16>
    %24 = vector.shape_cast %23 : vector<1x1x32x64xbf16> to vector<32x64xbf16>
    %cst_25 = arith.constant dense<0.000000e+00> : vector<192x64xf32>
    %25 = tpu.matmul %22, %24, %cst_25 {dimension_numbers = #tpu.dot_dimension_numbers<[1], [0], [0], [1], [0, 0, 1, 1], [], []>} : vector<192x32xbf16>, vector<32x64xbf16>, vector<192x64xf32> -> vector<192x64xf32>
    %26 = arith.addf %21, %25 : vector<192x64xf32>
    %27 = vector.extract_strided_slice %2 {offsets = [26, 0], sizes = [192, 32], strides = [1, 1]} : vector<264x32xbf16> to vector<192x32xbf16>
    %c1_26 = arith.constant 1 : index
    %c2_27 = arith.constant 2 : index
    %c0_28 = arith.constant 0 : index
    %c0_29 = arith.constant 0 : index
    %28 = vector.load %arg3[%c1_26, %c2_27, %c0_28, %c0_29] : memref<3x3x32x64xbf16, #tpu.memory_space<vmem>>, vector<1x1x32x64xbf16>
    %29 = vector.shape_cast %28 : vector<1x1x32x64xbf16> to vector<32x64xbf16>
    %cst_30 = arith.constant dense<0.000000e+00> : vector<192x64xf32>
    %30 = tpu.matmul %27, %29, %cst_30 {dimension_numbers = #tpu.dot_dimension_numbers<[1], [0], [0], [1], [0, 0, 1, 1], [], []>} : vector<192x32xbf16>, vector<32x64xbf16>, vector<192x64xf32> -> vector<192x64xf32>
    %31 = arith.addf %26, %30 : vector<192x64xf32>
    %32 = vector.extract_strided_slice %2 {offsets = [48, 0], sizes = [192, 32], strides = [1, 1]} : vector<264x32xbf16> to vector<192x32xbf16>
    %c2_31 = arith.constant 2 : index
    %c0_32 = arith.constant 0 : index
    %c0_33 = arith.constant 0 : index
    %c0_34 = arith.constant 0 : index
    %33 = vector.load %arg3[%c2_31, %c0_32, %c0_33, %c0_34] : memref<3x3x32x64xbf16, #tpu.memory_space<vmem>>, vector<1x1x32x64xbf16>
    %34 = vector.shape_cast %33 : vector<1x1x32x64xbf16> to vector<32x64xbf16>
    %cst_35 = arith.constant dense<0.000000e+00> : vector<192x64xf32>
    %35 = tpu.matmul %32, %34, %cst_35 {dimension_numbers = #tpu.dot_dimension_numbers<[1], [0], [0], [1], [0, 0, 1, 1], [], []>} : vector<192x32xbf16>, vector<32x64xbf16>, vector<192x64xf32> -> vector<192x64xf32>
    %36 = arith.addf %31, %35 : vector<192x64xf32>
    %37 = vector.extract_strided_slice %2 {offsets = [49, 0], sizes = [192, 32], strides = [1, 1]} : vector<264x32xbf16> to vector<192x32xbf16>
    %c2_36 = arith.constant 2 : index
    %c1_37 = arith.constant 1 : index
    %c0_38 = arith.constant 0 : index
    %c0_39 = arith.constant 0 : index
    %38 = vector.load %arg3[%c2_36, %c1_37, %c0_38, %c0_39] : memref<3x3x32x64xbf16, #tpu.memory_space<vmem>>, vector<1x1x32x64xbf16>
    %39 = vector.shape_cast %38 : vector<1x1x32x64xbf16> to vector<32x64xbf16>
    %cst_40 = arith.constant dense<0.000000e+00> : vector<192x64xf32>
    %40 = tpu.matmul %37, %39, %cst_40 {dimension_numbers = #tpu.dot_dimension_numbers<[1], [0], [0], [1], [0, 0, 1, 1], [], []>} : vector<192x32xbf16>, vector<32x64xbf16>, vector<192x64xf32> -> vector<192x64xf32>
    %41 = arith.addf %36, %40 : vector<192x64xf32>
    %42 = vector.extract_strided_slice %2 {offsets = [50, 0], sizes = [192, 32], strides = [1, 1]} : vector<264x32xbf16> to vector<192x32xbf16>
    %c2_41 = arith.constant 2 : index
    %c2_42 = arith.constant 2 : index
    %c0_43 = arith.constant 0 : index
    %c0_44 = arith.constant 0 : index
    %43 = vector.load %arg3[%c2_41, %c2_42, %c0_43, %c0_44] : memref<3x3x32x64xbf16, #tpu.memory_space<vmem>>, vector<1x1x32x64xbf16>
    %44 = vector.shape_cast %43 : vector<1x1x32x64xbf16> to vector<32x64xbf16>
    %cst_45 = arith.constant dense<0.000000e+00> : vector<192x64xf32>
    %45 = tpu.matmul %42, %44, %cst_45 {dimension_numbers = #tpu.dot_dimension_numbers<[1], [0], [0], [1], [0, 0, 1, 1], [], []>} : vector<192x32xbf16>, vector<32x64xbf16>, vector<192x64xf32> -> vector<192x64xf32>
    %46 = arith.addf %41, %45 : vector<192x64xf32>
    %c0_46 = arith.constant 0 : index
    %c0_47 = arith.constant 0 : index
    %47 = vector.load %arg4[%c0_46, %c0_47] : memref<1x64xf32, #tpu.memory_space<vmem>>, vector<1x64xf32>
    %48 = vector.broadcast %47 : vector<1x64xf32> to vector<192x64xf32>
    %49 = arith.mulf %46, %48 : vector<192x64xf32>
    %c0_48 = arith.constant 0 : index
    %c0_49 = arith.constant 0 : index
    %50 = vector.load %arg5[%c0_48, %c0_49] : memref<1x64xf32, #tpu.memory_space<vmem>>, vector<1x64xf32>
    %51 = vector.broadcast %50 : vector<1x64xf32> to vector<192x64xf32>
    %52 = arith.addf %49, %51 : vector<192x64xf32>
    %cst_50 = arith.constant 0.000000e+00 : f32
    %cst_51 = arith.constant 6.000000e+00 : f32
    %53 = vector.broadcast %cst_50 : f32 to vector<192x64xf32>
    %54 = arith.maximumf %53, %52 : vector<192x64xf32>
    %55 = vector.broadcast %cst_51 : f32 to vector<192x64xf32>
    %56 = arith.minimumf %55, %54 : vector<192x64xf32>
    %57 = vector.shape_cast %56 : vector<192x64xf32> to vector<8x24x64xf32>
    %58 = vector.extract_strided_slice %57 {offsets = [0, 0, 0], sizes = [8, 16, 64], strides = [1, 1, 1]} : vector<8x24x64xf32> to vector<8x16x64xf32>
    %c0_52 = arith.constant 0 : index
    %c0_53 = arith.constant 0 : index
    %c0_54 = arith.constant 0 : index
    %c0_55 = arith.constant 0 : index
    %59 = vector.load %arg6[%c0_52, %c0_53, %c0_54, %c0_55] : memref<1x8x16x64xf32, #tpu.memory_space<vmem>>, vector<1x8x16x64xf32>
    %60 = vector.shape_cast %59 : vector<1x8x16x64xf32> to vector<8x16x64xf32>
    %61 = vector.shape_cast %58 : vector<8x16x64xf32> to vector<1x8x16x64xf32>
    tpu.vector_store %arg6[%c0_52, %c0_53, %c0_54, %c0_55], %61 {strides = array<i32>} : memref<1x8x16x64xf32, #tpu.memory_space<vmem>>, vector<1x8x16x64xf32>,
    return
  }
  func.func @transform_0(%arg0: i32, %arg1: i32) -> (i32, i32, i32, i32, i32) {
    %c0_i32 = arith.constant 0 : i32
    %c0_i32_0 = arith.constant 0 : i32
    %c0_i32_1 = arith.constant 0 : i32
    %c0_i32_2 = arith.constant 0 : i32
    return %arg0, %arg1, %c0_i32, %c0_i32_0, %c0_i32_1 : i32, i32, i32, i32, i32
  }
  func.func @transform_1(%arg0: i32, %arg1: i32) -> (i32, i32, i32, i32) {
    %c0_i32 = arith.constant 0 : i32
    %c0_i32_0 = arith.constant 0 : i32
    %c0_i32_1 = arith.constant 0 : i32
    %c0_i32_2 = arith.constant 0 : i32
    %c0_i32_3 = arith.constant 0 : i32
    return %c0_i32, %c0_i32_0, %c0_i32_1, %c0_i32_2 : i32, i32, i32, i32
  }
  func.func @transform_2(%arg0: i32, %arg1: i32) -> (i32, i32) {
    %c0_i32 = arith.constant 0 : i32
    %c0_i32_0 = arith.constant 0 : i32
    %c0_i32_1 = arith.constant 0 : i32
    return %c0_i32, %c0_i32_0 : i32, i32
  }
  func.func @transform_3(%arg0: i32, %arg1: i32) -> (i32, i32) {
    %c0_i32 = arith.constant 0 : i32
    %c0_i32_0 = arith.constant 0 : i32
    %c0_i32_1 = arith.constant 0 : i32
    return %c0_i32, %c0_i32_0 : i32, i32
  }
  func.func @transform_4(%arg0: i32, %arg1: i32) -> (i32, i32, i32, i32) {
    %c0_i32 = arith.constant 0 : i32
    %c0_i32_0 = arith.constant 0 : i32
    %c0_i32_1 = arith.constant 0 : i32
    return %arg0, %arg1, %c0_i32, %c0_i32_0 : i32, i32, i32, i32
  }
}

</mosaic_0001>

<llo_original>
// kernel: conv_bn_relu6.1
$region0: #{conv_bn_relu6.1}
  #allocation0 [shape = 'u32[]', space=smem, size = 0x4, offset = 0x4, fixed_abs, tag = 'smem constant byte address 0x4 - core index']
  #allocation1 [shape = 'u32[144,128]{1,0:T(1,128)}', space=vmem, size = 0x12000, scoped, tag = 'internal scratch']
  %s0 = inlined_call_operand.vmem [shape: bf16[2,2,11,24,32], index: 0, kind: input, shape index: {}]
  %s1 = inlined_call_operand.vmem [shape: bf16[3,3,32,64], index: 1, kind: input, shape index: {}]
  %s2 = inlined_call_operand.vmem [shape: f32[1,64], index: 2, kind: input, shape index: {}]
  %s3 = inlined_call_operand.vmem [shape: f32[1,64], index: 3, kind: input, shape index: {}]
  %s4 = inlined_call_operand.hbm [shape: f32[2,16,16,64], index: 4, kind: output, shape index: {}]
  %s5 = sld [smem:[#allocation0]]
  $region49: #{conv_bn_relu6.1} parent=0
    _
  %s7 = ssub.s32 1, %s5
  %s8 = scalar_select 0, %s7, %s5
  $region1: #{conv_bn_relu6.1} parent=0
    #allocation2 [shape = 'u8[131072]{0}', space=vmem, size = 0x20000, scoped, tag = 'output window, operand 0']
    #allocation3 [shape = 's32[2]{0}', space=sflag, size = 0x8, scoped, tag = 'scoped memory for conv_bn_relu6.1']
    %9 = vsyncpa [#allocation3], 0
    %s10 = scalar_lea.sflag [#allocation3], 1
    %11 = vsyncpa %s10, 0
    loop: start=0, step=1, limit=6
    $region2: #{conv_bn_relu6.1} parent=1 // loop_pre_header
      _
    $region3: #{conv_bn_relu6.1} parent=1 // loop_header
      %s13 = sphi 0, %s17
      %p14 = scmp.ge.s32.totalorder %s13, 6
      %s20 = sphi 0, %s32
      %s21 = sphi 0, %s28
      %s22 = sphi 0, %s20
      %s23 = sphi 0, %s21
      %s24 = sphi 0, %s22
      %s25 = sphi 0, %s23
      %s37 = sphi 0, %s39
      %s40 = sphi 0, %s37
      %s41 = sphi 0, %s40
      %s57 = sphi 0, %s41
      %s61 = sphi 0, %s61
      %s63 = sphi 0, %s61
      %s64 = sphi 0, %s63
      %s78 = sphi 0, %s64
      %s82 = sphi 0, %s82
      %s84 = sphi 0, %s82
      %s85 = sphi 0, %s84
      %s99 = sphi 0, %s85
      %s103 = sphi 0, %s103
      %s105 = sphi 0, %s103
      %s106 = sphi 0, %s105
      %s120 = sphi 0, %s106
      %s128 = sphi 0, %s130
      %s131 = sphi 0, %s128
      %s132 = sphi 0, %s131
      %s148 = sphi 0, %s132
    $region4: #{conv_bn_relu6.1} parent=1 // loop_header_branch
      %16 = sbr.rel (%p14) target = $region8
    $region5: #{conv_bn_relu6.1} parent=1 // loop_body
      %s18 = ssub.s32 %s13, 1
      %s19 = ssub.s32 %s13, 2
      %s26 = sadd.s32 1, %s21
      %p27 = scmp.ge.s32.totalorder %s26, 2
      %s28 = scalar_select %p27, 0, %s26
      %s29 = sadd.s32 1, %s20
      %s30 = scalar_select %p27, %s29, %s20
      %p31 = scmp.ge.s32.totalorder %s30, 2
      %s32 = scalar_select %p31, 0, %s30
      %s33 = ssub.s32 %s20, %s32
      %s34 = ssub.s32 %s21, %s28
      %s35 = sor.u32 %s33, %s34
      %p36 = scmp.eq.s32.totalorder %s35, 0
      %s38 = sadd.s32 %s37, 1
      %s39 = scalar_select %p36, %s37, %s38
      %p42 = pneg %p36
      %p43 = scmp.eq.s32.totalorder %s13, 3
      %p44 = por %p42, %p43
      %p45 = scmp.ne.s32.totalorder %s37, %s40
      %p46 = scmp.eq.s32.totalorder %s13, 0
      %p47 = por %p45, %p46
      %p48 = scmp.ne.s32.totalorder %s37, %s40
      %p49 = scmp.eq.s32.totalorder %s18, 3
      %p50 = por %p48, %p49
      %p51 = scmp.ne.s32.totalorder %s40, %s41
      %p52 = scmp.eq.s32.totalorder %s18, 0
      %p53 = por %p51, %p52
      %p54 = scmp.ne.s32.totalorder %s40, %s41
      %p55 = scmp.eq.s32.totalorder %s19, 3
      %p56 = por %p54, %p55
      %p58 = scmp.ne.s32.totalorder %s41, %s57
      %p59 = scmp.eq.s32.totalorder %s19, 0
      %p60 = por %p58, %p59
      %s62 = sadd.s32 %s61, 1
      %p65 = scmp.eq.s32.totalorder %s13, 3
      %p66 = scmp.ne.s32.totalorder %s61, %s63
      %p67 = scmp.eq.s32.totalorder %s13, 0
      %p68 = por %p66, %p67
      %p69 = scmp.ne.s32.totalorder %s61, %s63
      %p70 = scmp.eq.s32.totalorder %s18, 3
      %p71 = por %p69, %p70
      %p72 = scmp.ne.s32.totalorder %s63, %s64
      %p73 = scmp.eq.s32.totalorder %s18, 0
      %p74 = por %p72, %p73
      %p75 = scmp.ne.s32.totalorder %s63, %s64
      %p76 = scmp.eq.s32.totalorder %s19, 3
      %p77 = por %p75, %p76
      %p79 = scmp.ne.s32.totalorder %s64, %s78
      %p80 = scmp.eq.s32.totalorder %s19, 0
      %p81 = por %p79, %p80
      %s83 = sadd.s32 %s82, 1
      %p86 = scmp.eq.s32.totalorder %s13, 3
      %p87 = scmp.ne.s32.totalorder %s82, %s84
      %p88 = scmp.eq.s32.totalorder %s13, 0
      %p89 = por %p87, %p88
      %p90 = scmp.ne.s32.totalorder %s82, %s84
      %p91 = scmp.eq.s32.totalorder %s18, 3
      %p92 = por %p90, %p91
      %p93 = scmp.ne.s32.totalorder %s84, %s85
      %p94 = scmp.eq.s32.totalorder %s18, 0
      %p95 = por %p93, %p94
      %p96 = scmp.ne.s32.totalorder %s84, %s85
      %p97 = scmp.eq.s32.totalorder %s19, 3
      %p98 = por %p96, %p97
      %p100 = scmp.ne.s32.totalorder %s85, %s99
      %p101 = scmp.eq.s32.totalorder %s19, 0
      %p102 = por %p100, %p101
      %s104 = sadd.s32 %s103, 1
      %p107 = scmp.eq.s32.totalorder %s13, 3
      %p108 = scmp.ne.s32.totalorder %s103, %s105
      %p109 = scmp.eq.s32.totalorder %s13, 0
      %p110 = por %p108, %p109
      %p111 = scmp.ne.s32.totalorder %s103, %s105
      %p112 = scmp.eq.s32.totalorder %s18, 3
      %p113 = por %p111, %p112
      %p114 = scmp.ne.s32.totalorder %s105, %s106
      %p115 = scmp.eq.s32.totalorder %s18, 0
      %p116 = por %p114, %p115
      %p117 = scmp.ne.s32.totalorder %s105, %s106
      %p118 = scmp.eq.s32.totalorder %s19, 3
      %p119 = por %p117, %p118
      %p121 = scmp.ne.s32.totalorder %s106, %s120
      %p122 = scmp.eq.s32.totalorder %s19, 0
      %p123 = por %p121, %p122
      %s124 = ssub.s32 %s20, %s32
      %s125 = ssub.s32 %s21, %s28
      %s126 = sor.u32 %s124, %s125
      %p127 = scmp.eq.s32.totalorder %s126, 0
      %s129 = sadd.s32 %s128, 1
      %s130 = scalar_select %p127, %s128, %s129
      %p133 = pneg %p127
      %p134 = scmp.eq.s32.totalorder %s13, 3
      %p135 = por %p133, %p134
      %p136 = scmp.ne.s32.totalorder %s128, %s131
      %p137 = scmp.eq.s32.totalorder %s13, 0
      %p138 = por %p136, %p137
      %p139 = scmp.ne.s32.totalorder %s128, %s131
      %p140 = scmp.eq.s32.totalorder %s18, 3
      %p141 = por %p139, %p140
      %p142 = scmp.ne.s32.totalorder %s131, %s132
      %p143 = scmp.eq.s32.totalorder %s18, 0
      %p144 = por %p142, %p143
      %p145 = scmp.ne.s32.totalorder %s131, %s132
      %p146 = scmp.eq.s32.totalorder %s19, 3
      %p147 = por %p145, %p146
      %p149 = scmp.ne.s32.totalorder %s132, %s148
      %p150 = scmp.eq.s32.totalorder %s19, 0
      %p151 = por %p149, %p150
      %p152 = scmp.le.s32.totalorder 1, %s13
      %p153 = scmp.lt.s32.totalorder %s13, 5
      %p154 = pnand %p152, %p153
      %p155 = pneg %p154
      // Predicated region
      $region9: #{conv_bn_relu6.1} parent=5 // pred_check
        _
      $region10: #{conv_bn_relu6.1} parent=5 // pred_check_branch
        %157 = sbr.rel (%p154) target = $region12
      $region11: #{conv_bn_relu6.1} parent=5 // pred_region
        %s158 = ssub.s32 %s13, 1
        // Predicated region
        $region13: #{conv_bn_relu6.1} parent=11 // pred_check
          %p159 = pneg %p74
        $region14: #{conv_bn_relu6.1} parent=11 // pred_check_branch
          %161 = sbr.rel (%p159) target = $region16
        $region15: #{conv_bn_relu6.1} parent=11 // pred_region
          _
        $region16: #{conv_bn_relu6.1} parent=11 // pred_fallthru
          _
        // Predicated region
        $region17: #{conv_bn_relu6.1} parent=11 // pred_check
          %p162 = pneg %p95
        $region18: #{conv_bn_relu6.1} parent=11 // pred_check_branch
          %164 = sbr.rel (%p162) target = $region20
        $region19: #{conv_bn_relu6.1} parent=11 // pred_region
          _
        $region20: #{conv_bn_relu6.1} parent=11 // pred_fallthru
          _
        // Predicated region
        $region21: #{conv_bn_relu6.1} parent=11 // pred_check
          %p165 = pneg %p116
        $region22: #{conv_bn_relu6.1} parent=11 // pred_check_branch
          %167 = sbr.rel (%p165) target = $region24
        $region23: #{conv_bn_relu6.1} parent=11 // pred_region
          _
        $region24: #{conv_bn_relu6.1} parent=11 // pred_fallthru
          _
      $region12: #{conv_bn_relu6.1} parent=5 // pred_fallthru
        _
      %p168 = scmp.lt.s32.totalorder %s13, 4
      // Predicated region
      $region25: #{conv_bn_relu6.1} parent=5 // pred_check
        %p169 = pneg %p168
      $region26: #{conv_bn_relu6.1} parent=5 // pred_check_branch
        %171 = sbr.rel (%p169) target = $region28
      $region27: #{conv_bn_relu6.1} parent=5 // pred_region
        // Predicated region
        $region29: #{conv_bn_relu6.1} parent=27 // pred_check
          %p172 = pneg %p47
        $region30: #{conv_bn_relu6.1} parent=27 // pred_check_branch
          %174 = sbr.rel (%p172) target = $region32
        $region31: #{conv_bn_relu6.1} parent=27 // pred_region
          %p175 = scmp.lt.s32.totalorder %s20, 1
          %s176 = scalar_select %p175, %s20, 1
          %p177 = scmp.lt.s32.totalorder %s21, 1
          %s178 = scalar_select %p177, %s21, 1
          %s179 = smul.addr %s178, 33
          %s180 = smul.addr %s176, 66
          %s181 = sadd.s32 %s179, %s180
          %s182 = smul.addr %s181, 4
          %s183 = scalar_lea.vmem %s0, %s182
        $region32: #{conv_bn_relu6.1} parent=27 // pred_fallthru
          _
      $region28: #{conv_bn_relu6.1} parent=5 // pred_fallthru
        _
      %p184 = scmp.le.s32.totalorder 1, %s13
      %p185 = scmp.lt.s32.totalorder %s13, 5
      %p186 = pnand %p184, %p185
      %p187 = pneg %p186
      // Predicated region
      $region33: #{conv_bn_relu6.1} parent=5 // pred_check
        _
      $region34: #{conv_bn_relu6.1} parent=5 // pred_check_branch
        %189 = sbr.rel (%p186) target = $region36
      $region35: #{conv_bn_relu6.1} parent=5 // pred_region
        %s190 = ssub.s32 %s13, 1
        %p191 = scmp.lt.s32.totalorder %s22, 1
        %s192 = scalar_select %p191, %s22, 1
        %p193 = scmp.lt.s32.totalorder %s23, 1
        %s194 = scalar_select %p193, %s23, 1
        %s195 = smul.addr %s194, 33
        %s196 = smul.addr %s192, 66
        %s197 = sadd.s32 %s195, %s196
        %s198 = smul.addr %s197, 4
        %s199 = scalar_lea.vmem %s0, %s198
        %p200 = pneg %p53
        %p201 = pneg %p50
        %p202 = pneg %p74
        %p203 = pneg %p71
        %p204 = pneg %p95
        %p205 = pneg %p92
        %p206 = pneg %p116
        %p207 = pneg %p113
        %p208 = pneg %p144
        %p209 = pneg %p141
        %s210 = sand.u32 %s131, 1
        %s211 = scalar_lea.sflag [#allocation3], %s210
        %s212 = sand.u32 %s131, 1
        %s213 = smul.addr %s212, 128
        %s214 = scalar_lea.vmem [#allocation2], %s213
        %p215 = scmp.lt.s32.totalorder %s22, 1
        %s216 = scalar_select %p215, %s22, 1
        %p217 = scmp.lt.s32.totalorder %s23, 1
        %s218 = scalar_select %p217, %s23, 1
        %s219 = smul.addr %s218, 33
        %s220 = smul.addr %s216, 66
        %s221 = sadd.s32 %s219, %s220
        %s222 = smul.addr %s221, 4
        %s223 = scalar_lea.vmem %s0, %s222
        %s224 = smul.u32 8, %s23
        %v226 = vld [vmem:[%s223] sm:$0xf]
        %v227 = vld [vmem:[%s223 + $0x4] sm:$0xf]
        %v228 = vld [vmem:[%s223 + $0x8] sm:$0xf]
        %v229 = vld [vmem:[%s223 + $0xc] sm:$0xf]
        %v230 = vld [vmem:[%s223 + $0x10] sm:$0xf]
        %v231 = vld [vmem:[%s223 + $0x14] sm:$0xf]
        %v232 = vld [vmem:[%s223 + $0x18] sm:$0xf]
        %v233 = vld [vmem:[%s223 + $0x1c] sm:$0xf]
        %v234 = vld [vmem:[%s223 + $0x20] sm:$0xf]
        %v235 = vld [vmem:[%s223 + $0x24] sm:$0xf]
        %v236 = vld [vmem:[%s223 + $0x28] sm:$0xf]
        %v237 = vld [vmem:[%s223 + $0x2c] sm:$0xf]
        %v238 = vld [vmem:[%s223 + $0x30] sm:$0xf]
        %v239 = vld [vmem:[%s223 + $0x34] sm:$0xf]
        %v240 = vld [vmem:[%s223 + $0x38] sm:$0xf]
        %v241 = vld [vmem:[%s223 + $0x3c] sm:$0xf]
        %v242 = vld [vmem:[%s223 + $0x40] sm:$0xf]
        %v243 = vld [vmem:[%s223 + $0x44] sm:$0xf]
        %v244 = vld [vmem:[%s223 + $0x48] sm:$0xf]
        %v245 = vld [vmem:[%s223 + $0x4c] sm:$0xf]
        %v246 = vld [vmem:[%s223 + $0x50] sm:$0xf]
        %v247 = vld [vmem:[%s223 + $0x54] sm:$0xf]
        %v248 = vld [vmem:[%s223 + $0x58] sm:$0xf]
        %v249 = vld [vmem:[%s223 + $0x5c] sm:$0xf]
        %v250 = vld [vmem:[%s223 + $0x60] sm:$0xf]
        %v251 = vld [vmem:[%s223 + $0x64] sm:$0xf]
        %v252 = vld [vmem:[%s223 + $0x68] sm:$0xf]
        %v253 = vld [vmem:[%s223 + $0x6c] sm:$0xf]
        %v254 = vld [vmem:[%s223 + $0x70] sm:$0xf]
        %v255 = vld [vmem:[%s223 + $0x74] sm:$0xf]
        %v256 = vld [vmem:[%s223 + $0x78] sm:$0xf]
        %v257 = vld [vmem:[%s1] sm:$0xf]
        %v258 = vld [vmem:[%s1 + $0x4] sm:$0xf]
        %v259 = vld [vmem:[%s1 + $0x8] sm:$0xf]
        %v260 = vld [vmem:[%s1 + $0xc] sm:$0xf]
        %s261 = scalar_lea.vmem %s1, 16
        %v262 = vld [vmem:[%s261] sm:$0xf]
        %v263 = vld [vmem:[%s261 + $0x4] sm:$0xf]
        %v264 = vld [vmem:[%s261 + $0x8] sm:$0xf]
        %v265 = vld [vmem:[%s261 + $0xc] sm:$0xf]
        %v291 = vunpack.c.l.b16 %v226
        %v292 = vunpack.c.l.b16 %v227
        %v293 = vunpack.c.l.b16 %v228
        %v294 = vunpack.c.l.b16 %v229
        %v295 = vunpack.c.l.b16 %v230
        %v296 = vunpack.c.l.b16 %v231
        %v297 = vunpack.c.l.b16 %v232
        %v298 = vunpack.c.l.b16 %v233
        %v299 = vunpack.c.l.b16 %v234
        %v300 = vunpack.c.l.b16 %v235
        %v301 = vunpack.c.l.b16 %v236
        %v302 = vunpack.c.l.b16 %v237
        %v303 = vunpack.c.l.b16 %v238
        %v304 = vunpack.c.l.b16 %v239
        %v305 = vunpack.c.l.b16 %v240
        %v306 = vunpack.c.l.b16 %v241
        %v307 = vunpack.c.l.b16 %v242
        %v308 = vunpack.c.l.b16 %v243
        %v309 = vunpack.c.l.b16 %v244
        %v310 = vunpack.c.l.b16 %v245
        %v311 = vunpack.c.l.b16 %v246
        %v312 = vunpack.c.l.b16 %v247
        %v313 = vunpack.c.l.b16 %v248
        %v314 = vunpack.c.l.b16 %v249
        %v315 = vunpack.c.l.b16 %v250
        %v316 = vpack.c.b16 %v292, %v291
        %v317 = vpack.c.b16 %v294, %v293
        %v318 = vpack.c.b16 %v296, %v295
        %v319 = vpack.c.b16 %v298, %v297
        %v320 = vpack.c.b16 %v300, %v299
        %v321 = vpack.c.b16 %v302, %v301
        %v322 = vpack.c.b16 %v304, %v303
        %v323 = vpack.c.b16 %v306, %v305
        %v324 = vpack.c.b16 %v308, %v307
        %v325 = vpack.c.b16 %v310, %v309
        %v326 = vpack.c.b16 %v312, %v311
        %v327 = vpack.c.b16 %v314, %v313
        %v328 = vpack.c.b16 %v315, %v315
        %vm329 = vsmask.f32 7424
        %v331 = vshrl.u32 %v316, 16
        %v333 = vshll.u32 %v316, 16
        %v335 = vrot.slane %v333, 1
        %v336 = vor.u32 %v331, %v335
        %v338 = vshll.u32 %v317, 16
        %v340 = vrot.slane %v338, 1
        %v341 = vsel %vm329, %v336, %v340
        %v342 = vshrl.u32 %v317, 16
        %v344 = vor.u32 %v342, %v340
        %v346 = vshll.u32 %v318, 16
        %v348 = vrot.slane %v346, 1
        %v349 = vsel %vm329, %v344, %v348
        %v350 = vshrl.u32 %v318, 16
        %v352 = vor.u32 %v350, %v348
        %v354 = vshll.u32 %v319, 16
        %v356 = vrot.slane %v354, 1
        %v357 = vsel %vm329, %v352, %v356
        %v358 = vshrl.u32 %v319, 16
        %v360 = vor.u32 %v358, %v356
        %v362 = vshll.u32 %v320, 16
        %v364 = vrot.slane %v362, 1
        %v365 = vsel %vm329, %v360, %v364
        %v366 = vshrl.u32 %v320, 16
        %v368 = vor.u32 %v366, %v364
        %v370 = vshll.u32 %v321, 16
        %v372 = vrot.slane %v370, 1
        %v373 = vsel %vm329, %v368, %v372
        %v374 = vshrl.u32 %v321, 16
        %v376 = vor.u32 %v374, %v372
        %v378 = vshll.u32 %v322, 16
        %v380 = vrot.slane %v378, 1
        %v381 = vsel %vm329, %v376, %v380
        %v382 = vshrl.u32 %v322, 16
        %v384 = vor.u32 %v382, %v380
        %v386 = vshll.u32 %v323, 16
        %v388 = vrot.slane %v386, 1
        %v389 = vsel %vm329, %v384, %v388
        %v390 = vshrl.u32 %v323, 16
        %v392 = vor.u32 %v390, %v388
        %v394 = vshll.u32 %v324, 16
        %v396 = vrot.slane %v394, 1
        %v397 = vsel %vm329, %v392, %v396
        %v398 = vshrl.u32 %v324, 16
        %v400 = vor.u32 %v398, %v396
        %v402 = vshll.u32 %v325, 16
        %v404 = vrot.slane %v402, 1
        %v405 = vsel %vm329, %v400, %v404
        %v406 = vshrl.u32 %v325, 16
        %v408 = vor.u32 %v406, %v404
        %v410 = vshll.u32 %v326, 16
        %v412 = vrot.slane %v410, 1
        %v413 = vsel %vm329, %v408, %v412
        %v414 = vshrl.u32 %v326, 16
        %v416 = vor.u32 %v414, %v412
        %v418 = vshll.u32 %v327, 16
        %v420 = vrot.slane %v418, 1
        %v421 = vsel %vm329, %v416, %v420
        %v422 = vshrl.u32 %v327, 16
        %v424 = vor.u32 %v422, %v420
        %v426 = vshll.u32 %v328, 16
        %v428 = vrot.slane %v426, 1
        %v429 = vsel %vm329, %v424, %v428
        %v434 = vunpack.c.l.b16 %v262
        %v435 = vunpack.c.l.b16 %v263
        %v436 = vunpack.c.l.b16 %v264
        %v437 = vunpack.c.l.b16 %v265
        %v438 = vpack.c.b16 %v435, %v434
        %v439 = vpack.c.b16 %v437, %v436
        %vm442 = vcmask 261120
        %v444 = vsel %vm442, %v341, 0
        %v447 = vsel %vm442, %v349, 0
        %v450 = vsel %vm442, %v357, 0
        %v453 = vsel %vm442, %v365, 0
        %v456 = vsel %vm442, %v373, 0
        %v459 = vsel %vm442, %v381, 0
        %v462 = vsel %vm442, %v389, 0
        %v465 = vsel %vm442, %v397, 0
        %v468 = vsel %vm442, %v405, 0
        %v471 = vsel %vm442, %v413, 0
        %v474 = vsel %vm442, %v421, 0
        %v477 = vsel %vm442, %v429, 0
        %479 = vmatprep.subr.bf16.mxu0 0
        %480 = vmatpush1.bf16.msra.mxu0 %v438
        %481 = vmatprep.subr.bf16.mxu0 0
        %482 = vmatpush1.bf16.msra.mxu0 %v439
        %483 = vmatprep.subr.bf16.mxu0 0
        %484 = vmatpush1.bf16.msra.mxu0 0
        %485 = vmatprep.subr.bf16.mxu0 0
        %486 = vmatpush1.bf16.msra.mxu0 0
        %487 = vmatprep.subr.bf16.mxu0 0
        %488 = vmatpush1.bf16.msra.mxu0 0
        %489 = vmatprep.subr.bf16.mxu0 0
        %490 = vmatpush1.bf16.msra.mxu0 0
        %491 = vmatprep.subr.bf16.mxu0 0
        %492 = vmatpush1.bf16.msra.mxu0 0
        %493 = vmatprep.subr.bf16.mxu0 0
        %494 = vmatpush1.bf16.msra.mxu0 0
        %495 = vmatprep.subr.bf16.mxu0 0
        %496 = vmatpush1.bf16.msra.mxu0 0
        %497 = vmatprep.subr.bf16.mxu0 0
        %498 = vmatpush1.bf16.msra.mxu0 0
        %499 = vmatprep.subr.bf16.mxu0 0
        %500 = vmatpush1.bf16.msra.mxu0 0
        %501 = vmatprep.subr.bf16.mxu0 0
        %502 = vmatpush1.bf16.msra.mxu0 0
        %503 = vmatprep.subr.bf16.mxu0 0
        %504 = vmatpush1.bf16.msra.mxu0 0
        %505 = vmatprep.subr.bf16.mxu0 0
        %506 = vmatpush1.bf16.msra.mxu0 0
        %507 = vmatprep.subr.bf16.mxu0 0
        %508 = vmatpush1.bf16.msra.mxu0 0
        %509 = vmatprep.subr.bf16.mxu0 0
        %510 = vmatpush1.bf16.msra.mxu0 0
        %511 = vmatprep.mubr.bf16.mxu0 0
        %512 = vmatmul.mubr.bf16.gmra.mrb[0].mxu0 %v444
        %v513 = vpop.f32.mrb[0].mxu0
        %v514 = vadd.f32 0.0, %v513
        %v515 = vpop.f32.mrb[0].mxu0
        %v516 = vpop.f32.mrb[0].mxu0
        %v517 = vadd.f32 0.0, %v516
        %v518 = vpop.f32.mrb[0].mxu0
        %519 = vmatprep.mubr.bf16.mxu0 0
        %520 = vmatmul.mubr.bf16.gmra.mrb[0].mxu0 %v447
        %v521 = vpop.f32.mrb[0].mxu0
        %v522 = vpop.f32.mrb[0].mxu0
        %v523 = vpop.f32.mrb[0].mxu0
        %v524 = vadd.f32 0.0, %v523
        %v525 = vpop.f32.mrb[0].mxu0
        %526 = vmatprep.mubr.bf16.mxu0 0
        %527 = vmatmul.mubr.bf16.gmra.mrb[0].mxu0 %v450
        %v528 = vpop.f32.mrb[0].mxu0
        %v529 = vadd.f32 0.0, %v528
        %v530 = vpop.f32.mrb[0].mxu0
        %v531 = vpop.f32.mrb[0].mxu0
        %v532 = vpop.f32.mrb[0].mxu0
        %533 = vmatprep.mubr.bf16.mxu0 0
        %534 = vmatmul.mubr.bf16.gmra.mrb[0].mxu0 %v453
        %v535 = vpop.f32.mrb[0].mxu0
        %v536 = vadd.f32 0.0, %v535
        %v537 = vpop.f32.mrb[0].mxu0
        %v538 = vpop.f32.mrb[0].mxu0
        %v539 = vadd.f32 0.0, %v538
        %v540 = vpop.f32.mrb[0].mxu0
        %541 = vmatprep.mubr.bf16.mxu0 0
        %542 = vmatmul.mubr.bf16.gmra.mrb[0].mxu0 %v456
        %v543 = vpop.f32.mrb[0].mxu0
        %v544 = vpop.f32.mrb[0].mxu0
        %v545 = vpop.f32.mrb[0].mxu0
        %v546 = vadd.f32 0.0, %v545
        %v547 = vpop.f32.mrb[0].mxu0
        %548 = vmatprep.mubr.bf16.mxu0 0
        %549 = vmatmul.mubr.bf16.gmra.mrb[0].mxu0 %v459
        %v550 = vpop.f32.mrb[0].mxu0
        %v551 = vadd.f32 0.0, %v550
        %v552 = vpop.f32.mrb[0].mxu0
        %v553 = vpop.f32.mrb[0].mxu0
        %v554 = vpop.f32.mrb[0].mxu0
        %555 = vmatprep.mubr.bf16.mxu0 0
        %556 = vmatmul.mubr.bf16.gmra.mrb[0].mxu0 %v462
        %v557 = vpop.f32.mrb[0].mxu0
        %v558 = vadd.f32 0.0, %v557
        %v559 = vpop.f32.mrb[0].mxu0
        %v560 = vpop.f32.mrb[0].mxu0
        %v561 = vadd.f32 0.0, %v560
        %v562 = vpop.f32.mrb[0].mxu0
        %563 = vmatprep.mubr.bf16.mxu0 0
        %564 = vmatmul.mubr.bf16.gmra.mrb[0].mxu0 %v465
        %v565 = vpop.f32.mrb[0].mxu0
        %v566 = vpop.f32.mrb[0].mxu0
        %v567 = vpop.f32.mrb[0].mxu0
        %v568 = vadd.f32 0.0, %v567
        %v569 = vpop.f32.mrb[0].mxu0
        %570 = vmatprep.mubr.bf16.mxu0 0
        %571 = vmatmul.mubr.bf16.gmra.mrb[0].mxu0 %v468
        %v572 = vpop.f32.mrb[0].mxu0
        %v573 = vadd.f32 0.0, %v572
        %v574 = vpop.f32.mrb[0].mxu0
        %v575 = vpop.f32.mrb[0].mxu0
        %v576 = vpop.f32.mrb[0].mxu0
        %577 = vmatprep.mubr.bf16.mxu0 0
        %578 = vmatmul.mubr.bf16.gmra.mrb[0].mxu0 %v471
        %v579 = vpop.f32.mrb[0].mxu0
        %v580 = vadd.f32 0.0, %v579
        %v581 = vpop.f32.mrb[0].mxu0
        %v582 = vpop.f32.mrb[0].mxu0
        %v583 = vadd.f32 0.0, %v582
        %v584 = vpop.f32.mrb[0].mxu0
        %585 = vmatprep.mubr.bf16.mxu0 0
        %586 = vmatmul.mubr.bf16.gmra.mrb[0].mxu0 %v474
        %v587 = vpop.f32.mrb[0].mxu0
        %v588 = vpop.f32.mrb[0].mxu0
        %v589 = vpop.f32.mrb[0].mxu0
        %v590 = vadd.f32 0.0, %v589
        %v591 = vpop.f32.mrb[0].mxu0
        %592 = vmatprep.mubr.bf16.mxu0 0
        %593 = vmatmul.mubr.bf16.gmra.mrb[0].mxu0 %v477
        %v594 = vpop.f32.mrb[0].mxu0
        %v595 = vadd.f32 0.0, %v594
        %v596 = vpop.f32.mrb[0].mxu0
        %v597 = vpop.f32.mrb[0].mxu0
        %v598 = vpop.f32.mrb[0].mxu0
        %599 = vdwg.mxu0
        %v604 = vunpack.c.l.b16 %v257
        %v605 = vunpack.c.l.b16 %v258
        %v606 = vunpack.c.l.b16 %v259
        %v607 = vunpack.c.l.b16 %v260
        %v608 = vpack.c.b16 %v605, %v604
        %v609 = vpack.c.b16 %v607, %v606
        %v612 = vsel %vm442, %v316, 0
        %v614 = vsel %vm442, %v317, 0
        %v616 = vsel %vm442, %v318, 0
        %v618 = vsel %vm442, %v319, 0
        %v620 = vsel %vm442, %v320, 0
        %v622 = vsel %vm442, %v321, 0
        %v624 = vsel %vm442, %v322, 0
        %v626 = vsel %vm442, %v323, 0
        %v628 = vsel %vm442, %v324, 0
        %v630 = vsel %vm442, %v325, 0
        %v632 = vsel %vm442, %v326, 0
        %v634 = vsel %vm442, %v327, 0
        %636 = vmatprep.subr.bf16.mxu0 0
        %637 = vmatpush1.bf16.msra.mxu0 %v608
        %638 = vmatprep.subr.bf16.mxu0 0
        %639 = vmatpush1.bf16.msra.mxu0 %v609
        %640 = vmatprep.subr.bf16.mxu0 0
        %641 = vmatpush1.bf16.msra.mxu0 0
        %642 = vmatprep.subr.bf16.mxu0 0
        %643 = vmatpush1.bf16.msra.mxu0 0
        %644 = vmatprep.subr.bf16.mxu0 0
        %645 = vmatpush1.bf16.msra.mxu0 0
        %646 = vmatprep.subr.bf16.mxu0 0
        %647 = vmatpush1.bf16.msra.mxu0 0
        %648 = vmatprep.subr.bf16.mxu0 0
        %649 = vmatpush1.bf16.msra.mxu0 0
        %650 = vmatprep.subr.bf16.mxu0 0
        %651 = vmatpush1.bf16.msra.mxu0 0
        %652 = vmatprep.subr.bf16.mxu0 0
        %653 = vmatpush1.bf16.msra.mxu0 0
        %654 = vmatprep.subr.bf16.mxu0 0
        %655 = vmatpush1.bf16.msra.mxu0 0
        %656 = vmatprep.subr.bf16.mxu0 0
        %657 = vmatpush1.bf16.msra.mxu0 0
        %658 = vmatprep.subr.bf16.mxu0 0
        %659 = vmatpush1.bf16.msra.mxu0 0
        %660 = vmatprep.subr.bf16.mxu0 0
        %661 = vmatpush1.bf16.msra.mxu0 0
        %662 = vmatprep.subr.bf16.mxu0 0
        %663 = vmatpush1.bf16.msra.mxu0 0
        %664 = vmatprep.subr.bf16.mxu0 0
        %665 = vmatpush1.bf16.msra.mxu0 0
        %666 = vmatprep.subr.bf16.mxu0 0
        %667 = vmatpush1.bf16.msra.mxu0 0
        %668 = vmatprep.mubr.bf16.mxu0 0
        %669 = vmatmul.mubr.bf16.gmra.mrb[0].mxu0 %v612
        %v670 = vpop.f32.mrb[0].mxu0
        %v671 = vadd.f32 %v514, %v670
        %v672 = vpop.f32.mrb[0].mxu0
        %v673 = vpop.f32.mrb[0].mxu0
        %v674 = vadd.f32 %v517, %v673
        %v675 = vpop.f32.mrb[0].mxu0
        %676 = vmatprep.mubr.bf16.mxu0 0
        %677 = vmatmul.mubr.bf16.gmra.mrb[0].mxu0 %v614
        %v678 = vpop.f32.mrb[0].mxu0
        %v679 = vpop.f32.mrb[0].mxu0
        %v680 = vpop.f32.mrb[0].mxu0
        %v681 = vadd.f32 %v524, %v680
        %v682 = vpop.f32.mrb[0].mxu0
        %683 = vmatprep.mubr.bf16.mxu0 0
        %684 = vmatmul.mubr.bf16.gmra.mrb[0].mxu0 %v616
        %v685 = vpop.f32.mrb[0].mxu0
        %v686 = vadd.f32 %v529, %v685
        %v687 = vpop.f32.mrb[0].mxu0
        %v688 = vpop.f32.mrb[0].mxu0
        %v689 = vpop.f32.mrb[0].mxu0
        %690 = vmatprep.mubr.bf16.mxu0 0
        %691 = vmatmul.mubr.bf16.gmra.mrb[0].mxu0 %v618
        %v692 = vpop.f32.mrb[0].mxu0
        %v693 = vadd.f32 %v536, %v692
        %v694 = vpop.f32.mrb[0].mxu0
        %v695 = vpop.f32.mrb[0].mxu0
        %v696 = vadd.f32 %v539, %v695
        %v697 = vpop.f32.mrb[0].mxu0
        %698 = vmatprep.mubr.bf16.mxu0 0
        %699 = vmatmul.mubr.bf16.gmra.mrb[0].mxu0 %v620
        %v700 = vpop.f32.mrb[0].mxu0
        %v701 = vpop.f32.mrb[0].mxu0
        %v702 = vpop.f32.mrb[0].mxu0
        %v703 = vadd.f32 %v546, %v702
        %v704 = vpop.f32.mrb[0].mxu0
        %705 = vmatprep.mubr.bf16.mxu0 0
        %706 = vmatmul.mubr.bf16.gmra.mrb[0].mxu0 %v622
        %v707 = vpop.f32.mrb[0].mxu0
        %v708 = vadd.f32 %v551, %v707
        %v709 = vpop.f32.mrb[0].mxu0
        %v710 = vpop.f32.mrb[0].mxu0
        %v711 = vpop.f32.mrb[0].mxu0
        %712 = vmatprep.mubr.bf16.mxu0 0
        %713 = vmatmul.mubr.bf16.gmra.mrb[0].mxu0 %v624
        %v714 = vpop.f32.mrb[0].mxu0
        %v715 = vadd.f32 %v558, %v714
        %v716 = vpop.f32.mrb[0].mxu0
        %v717 = vpop.f32.mrb[0].mxu0
        %v718 = vadd.f32 %v561, %v717
        %v719 = vpop.f32.mrb[0].mxu0
        %720 = vmatprep.mubr.bf16.mxu0 0
        %721 = vmatmul.mubr.bf16.gmra.mrb[0].mxu0 %v626
        %v722 = vpop.f32.mrb[0].mxu0
        %v723 = vpop.f32.mrb[0].mxu0
        %v724 = vpop.f32.mrb[0].mxu0
        %v725 = vadd.f32 %v568, %v724
        %v726 = vpop.f32.mrb[0].mxu0
        %727 = vmatprep.mubr.bf16.mxu0 0
        %728 = vmatmul.mubr.bf16.gmra.mrb[0].mxu0 %v628
        %v729 = vpop.f32.mrb[0].mxu0
        %v730 = vadd.f32 %v573, %v729
        %v731 = vpop.f32.mrb[0].mxu0
        %v732 = vpop.f32.mrb[0].mxu0
        %v733 = vpop.f32.mrb[0].mxu0
        %734 = vmatprep.mubr.bf16.mxu0 0
        %735 = vmatmul.mubr.bf16.gmra.mrb[0].mxu0 %v630
        %v736 = vpop.f32.mrb[0].mxu0
        %v737 = vadd.f32 %v580, %v736
        %v738 = vpop.f32.mrb[0].mxu0
        %v739 = vpop.f32.mrb[0].mxu0
        %v740 = vadd.f32 %v583, %v739
        %v741 = vpop.f32.mrb[0].mxu0
        %742 = vmatprep.mubr.bf16.mxu0 0
        %743 = vmatmul.mubr.bf16.gmra.mrb[0].mxu0 %v632
        %v744 = vpop.f32.mrb[0].mxu0
        %v745 = vpop.f32.mrb[0].mxu0
        %v746 = vpop.f32.mrb[0].mxu0
        %v747 = vadd.f32 %v590, %v746
        %v748 = vpop.f32.mrb[0].mxu0
        %749 = vmatprep.mubr.bf16.mxu0 0
        %750 = vmatmul.mubr.bf16.gmra.mrb[0].mxu0 %v634
        %v751 = vpop.f32.mrb[0].mxu0
        %v752 = vadd.f32 %v595, %v751
        %v753 = vpop.f32.mrb[0].mxu0
        %v754 = vpop.f32.mrb[0].mxu0
        %v755 = vpop.f32.mrb[0].mxu0
        %756 = vdwg.mxu0
        %s757 = scalar_lea.vmem %s1, 32
        %v758 = vld [vmem:[%s757] sm:$0xf]
        %v759 = vld [vmem:[%s757 + $0x4] sm:$0xf]
        %v760 = vld [vmem:[%s757 + $0x8] sm:$0xf]
        %v761 = vld [vmem:[%s757 + $0xc] sm:$0xf]
        %vm762 = vcmask 1046528
        %v763 = vrot.slane %v316, 1
        %v764 = vrot.slane %v317, 1
        %v765 = vsel %vm762, %v763, %v764
        %v766 = vrot.slane %v318, 1
        %v767 = vsel %vm762, %v764, %v766
        %v768 = vrot.slane %v319, 1
        %v769 = vsel %vm762, %v766, %v768
        %v770 = vrot.slane %v320, 1
        %v771 = vsel %vm762, %v768, %v770
        %v772 = vrot.slane %v321, 1
        %v773 = vsel %vm762, %v770, %v772
        %v774 = vrot.slane %v322, 1
        %v775 = vsel %vm762, %v772, %v774
        %v776 = vrot.slane %v323, 1
        %v777 = vsel %vm762, %v774, %v776
        %v778 = vrot.slane %v324, 1
        %v779 = vsel %vm762, %v776, %v778
        %v780 = vrot.slane %v325, 1
        %v781 = vsel %vm762, %v778, %v780
        %v782 = vrot.slane %v326, 1
        %v783 = vsel %vm762, %v780, %v782
        %v784 = vrot.slane %v327, 1
        %v785 = vsel %vm762, %v782, %v784
        %v786 = vrot.slane %v328, 1
        %v787 = vsel %vm762, %v784, %v786
        %v792 = vunpack.c.l.b16 %v758
        %v793 = vunpack.c.l.b16 %v759
        %v794 = vunpack.c.l.b16 %v760
        %v795 = vunpack.c.l.b16 %v761
        %v796 = vpack.c.b16 %v793, %v792
        %v797 = vpack.c.b16 %v795, %v794
        %v801 = vsel %vm442, %v765, 0
        %v804 = vsel %vm442, %v767, 0
        %v807 = vsel %vm442, %v769, 0
        %v810 = vsel %vm442, %v771, 0
        %v813 = vsel %vm442, %v773, 0
        %v816 = vsel %vm442, %v775, 0
        %v819 = vsel %vm442, %v777, 0
        %v822 = vsel %vm442, %v779, 0
        %v825 = vsel %vm442, %v781, 0
        %v828 = vsel %vm442, %v783, 0
        %v831 = vsel %vm442, %v785, 0
        %v834 = vsel %vm442, %v787, 0
        %836 = vmatprep.subr.bf16.mxu0 0
        %837 = vmatpush1.bf16.msra.mxu0 %v796
        %838 = vmatprep.subr.bf16.mxu0 0
        %839 = vmatpush1.bf16.msra.mxu0 %v797
        %840 = vmatprep.subr.bf16.mxu0 0
        %841 = vmatpush1.bf16.msra.mxu0 0
        %842 = vmatprep.subr.bf16.mxu0 0
        %843 = vmatpush1.bf16.msra.mxu0 0
        %844 = vmatprep.subr.bf16.mxu0 0
        %845 = vmatpush1.bf16.msra.mxu0 0
        %846 = vmatprep.subr.bf16.mxu0 0
        %847 = vmatpush1.bf16.msra.mxu0 0
        %848 = vmatprep.subr.bf16.mxu0 0
        %849 = vmatpush1.bf16.msra.mxu0 0
        %850 = vmatprep.subr.bf16.mxu0 0
        %851 = vmatpush1.bf16.msra.mxu0 0
        %852 = vmatprep.subr.bf16.mxu0 0
        %853 = vmatpush1.bf16.msra.mxu0 0
        %854 = vmatprep.subr.bf16.mxu0 0
        %855 = vmatpush1.bf16.msra.mxu0 0
        %856 = vmatprep.subr.bf16.mxu0 0
        %857 = vmatpush1.bf16.msra.mxu0 0
        %858 = vmatprep.subr.bf16.mxu0 0
        %859 = vmatpush1.bf16.msra.mxu0 0
        %860 = vmatprep.subr.bf16.mxu0 0
        %861 = vmatpush1.bf16.msra.mxu0 0
        %862 = vmatprep.subr.bf16.mxu0 0
        %863 = vmatpush1.bf16.msra.mxu0 0
        %864 = vmatprep.subr.bf16.mxu0 0
        %865 = vmatpush1.bf16.msra.mxu0 0
        %866 = vmatprep.subr.bf16.mxu0 0
        %867 = vmatpush1.bf16.msra.mxu0 0
        %868 = vmatprep.mubr.bf16.mxu0 0
        %869 = vmatmul.mubr.bf16.gmra.mrb[0].mxu0 %v801
        %v870 = vpop.f32.mrb[0].mxu0
        %v871 = vadd.f32 0.0, %v870
        %v872 = vpop.f32.mrb[0].mxu0
        %v873 = vpop.f32.mrb[0].mxu0
        %v874 = vadd.f32 0.0, %v873
        %v875 = vpop.f32.mrb[0].mxu0
        %876 = vmatprep.mubr.bf16.mxu0 0
        %877 = vmatmul.mubr.bf16.gmra.mrb[0].mxu0 %v804
        %v878 = vpop.f32.mrb[0].mxu0
        %v879 = vpop.f32.mrb[0].mxu0
        %v880 = vpop.f32.mrb[0].mxu0
        %v881 = vadd.f32 0.0, %v880
        %v882 = vpop.f32.mrb[0].mxu0
        %883 = vmatprep.mubr.bf16.mxu0 0
        %884 = vmatmul.mubr.bf16.gmra.mrb[0].mxu0 %v807
        %v885 = vpop.f32.mrb[0].mxu0
        %v886 = vadd.f32 0.0, %v885
        %v887 = vpop.f32.mrb[0].mxu0
        %v888 = vpop.f32.mrb[0].mxu0
        %v889 = vpop.f32.mrb[0].mxu0
        %890 = vmatprep.mubr.bf16.mxu0 0
        %891 = vmatmul.mubr.bf16.gmra.mrb[0].mxu0 %v810
        %v892 = vpop.f32.mrb[0].mxu0
        %v893 = vadd.f32 0.0, %v892
        %v894 = vpop.f32.mrb[0].mxu0
        %v895 = vpop.f32.mrb[0].mxu0
        %v896 = vadd.f32 0.0, %v895
        %v897 = vpop.f32.mrb[0].mxu0
        %898 = vmatprep.mubr.bf16.mxu0 0
        %899 = vmatmul.mubr.bf16.gmra.mrb[0].mxu0 %v813
        %v900 = vpop.f32.mrb[0].mxu0
        %v901 = vpop.f32.mrb[0].mxu0
        %v902 = vpop.f32.mrb[0].mxu0
        %v903 = vadd.f32 0.0, %v902
        %v904 = vpop.f32.mrb[0].mxu0
        %905 = vmatprep.mubr.bf16.mxu0 0
        %906 = vmatmul.mubr.bf16.gmra.mrb[0].mxu0 %v816
        %v907 = vpop.f32.mrb[0].mxu0
        %v908 = vadd.f32 0.0, %v907
        %v909 = vpop.f32.mrb[0].mxu0
        %v910 = vpop.f32.mrb[0].mxu0
        %v911 = vpop.f32.mrb[0].mxu0
        %912 = vmatprep.mubr.bf16.mxu0 0
        %913 = vmatmul.mubr.bf16.gmra.mrb[0].mxu0 %v819
        %v914 = vpop.f32.mrb[0].mxu0
        %v915 = vadd.f32 0.0, %v914
        %v916 = vpop.f32.mrb[0].mxu0
        %v917 = vpop.f32.mrb[0].mxu0
        %v918 = vadd.f32 0.0, %v917
        %v919 = vpop.f32.mrb[0].mxu0
        %920 = vmatprep.mubr.bf16.mxu0 0
        %921 = vmatmul.mubr.bf16.gmra.mrb[0].mxu0 %v822
        %v922 = vpop.f32.mrb[0].mxu0
        %v923 = vpop.f32.mrb[0].mxu0
        %v924 = vpop.f32.mrb[0].mxu0
        %v925 = vadd.f32 0.0, %v924
        %v926 = vpop.f32.mrb[0].mxu0
        %927 = vmatprep.mubr.bf16.mxu0 0
        %928 = vmatmul.mubr.bf16.gmra.mrb[0].mxu0 %v825
        %v929 = vpop.f32.mrb[0].mxu0
        %v930 = vadd.f32 0.0, %v929
        %v931 = vpop.f32.mrb[0].mxu0
        %v932 = vpop.f32.mrb[0].mxu0
        %v933 = vpop.f32.mrb[0].mxu0
        %934 = vmatprep.mubr.bf16.mxu0 0
        %935 = vmatmul.mubr.bf16.gmra.mrb[0].mxu0 %v828
        %v936 = vpop.f32.mrb[0].mxu0
        %v937 = vadd.f32 0.0, %v936
        %v938 = vpop.f32.mrb[0].mxu0
        %v939 = vpop.f32.mrb[0].mxu0
        %v940 = vadd.f32 0.0, %v939
        %v941 = vpop.f32.mrb[0].mxu0
        %942 = vmatprep.mubr.bf16.mxu0 0
        %943 = vmatmul.mubr.bf16.gmra.mrb[0].mxu0 %v831
        %v944 = vpop.f32.mrb[0].mxu0
        %v945 = vpop.f32.mrb[0].mxu0
        %v946 = vpop.f32.mrb[0].mxu0
        %v947 = vadd.f32 0.0, %v946
        %v948 = vpop.f32.mrb[0].mxu0
        %949 = vmatprep.mubr.bf16.mxu0 0
        %950 = vmatmul.mubr.bf16.gmra.mrb[0].mxu0 %v834
        %v951 = vpop.f32.mrb[0].mxu0
        %v952 = vadd.f32 0.0, %v951
        %v953 = vpop.f32.mrb[0].mxu0
        %v954 = vpop.f32.mrb[0].mxu0
        %v955 = vpop.f32.mrb[0].mxu0
        %956 = vdwg.mxu0
        %v957 = vadd.f32 %v671, %v871
        %v958 = vadd.f32 %v674, %v874
        %v959 = vadd.f32 %v681, %v881
        %v960 = vadd.f32 %v686, %v886
        %v961 = vadd.f32 %v693, %v893
        %v962 = vadd.f32 %v696, %v896
        %v963 = vadd.f32 %v703, %v903
        %v964 = vadd.f32 %v708, %v908
        %v965 = vadd.f32 %v715, %v915
        %v966 = vadd.f32 %v718, %v918
        %v967 = vadd.f32 %v725, %v925
        %v968 = vadd.f32 %v730, %v930
        %v969 = vadd.f32 %v737, %v937
        %v970 = vadd.f32 %v740, %v940
        %v971 = vadd.f32 %v747, %v947
        %v972 = vadd.f32 %v752, %v952
        %s973 = scalar_lea.vmem %s1, 48
        %v974 = vld [vmem:[%s973] sm:$0xf]
        %v975 = vld [vmem:[%s973 + $0x4] sm:$0xf]
        %v976 = vld [vmem:[%s973 + $0x8] sm:$0xf]
        %v977 = vld [vmem:[%s973 + $0xc] sm:$0xf]
        %v980 = vunpack.c.l.b16 %v251
        %v981 = vunpack.c.l.b16 %v252
        %v982 = vpack.c.b16 %v295, %v294
        %v983 = vpack.c.b16 %v297, %v296
        %v984 = vpack.c.b16 %v299, %v298
        %v985 = vpack.c.b16 %v301, %v300
        %v986 = vpack.c.b16 %v303, %v302
        %v987 = vpack.c.b16 %v305, %v304
        %v988 = vpack.c.b16 %v307, %v306
        %v989 = vpack.c.b16 %v309, %v308
        %v990 = vpack.c.b16 %v311, %v310
        %v991 = vpack.c.b16 %v313, %v312
        %v992 = vpack.c.b16 %v315, %v314
        %v993 = vpack.c.b16 %v981, %v980
        %v998 = vunpack.c.l.b16 %v974
        %v999 = vunpack.c.l.b16 %v975
        %v1000 = vunpack.c.l.b16 %v976
        %v1001 = vunpack.c.l.b16 %v977
        %v1002 = vpack.c.b16 %v999, %v998
        %v1003 = vpack.c.b16 %v1001, %v1000
        %v1007 = vsel %vm442, %v982, 0
        %v1010 = vsel %vm442, %v983, 0
        %v1013 = vsel %vm442, %v984, 0
        %v1016 = vsel %vm442, %v985, 0
        %v1019 = vsel %vm442, %v986, 0
        %v1022 = vsel %vm442, %v987, 0
        %v1025 = vsel %vm442, %v988, 0
        %v1028 = vsel %vm442, %v989, 0
        %v1031 = vsel %vm442, %v990, 0
        %v1034 = vsel %vm442, %v991, 0
        %v1037 = vsel %vm442, %v992, 0
        %v1040 = vsel %vm442, %v993, 0
        %1042 = vmatprep.subr.bf16.mxu0 0
        %1043 = vmatpush1.bf16.msra.mxu0 %v1002
        %1044 = vmatprep.subr.bf16.mxu0 0
        %1045 = vmatpush1.bf16.msra.mxu0 %v1003
        %1046 = vmatprep.subr.bf16.mxu0 0
        %1047 = vmatpush1.bf16.msra.mxu0 0
        %1048 = vmatprep.subr.bf16.mxu0 0
        %1049 = vmatpush1.bf16.msra.mxu0 0
        %1050 = vmatprep.subr.bf16.mxu0 0
        %1051 = vmatpush1.bf16.msra.mxu0 0
        %1052 = vmatprep.subr.bf16.mxu0 0
        %1053 = vmatpush1.bf16.msra.mxu0 0
        %1054 = vmatprep.subr.bf16.mxu0 0
        %1055 = vmatpush1.bf16.msra.mxu0 0
        %1056 = vmatprep.subr.bf16.mxu0 0
        %1057 = vmatpush1.bf16.msra.mxu0 0
        %1058 = vmatprep.subr.bf16.mxu0 0
        %1059 = vmatpush1.bf16.msra.mxu0 0
        %1060 = vmatprep.subr.bf16.mxu0 0
        %1061 = vmatpush1.bf16.msra.mxu0 0
        %1062 = vmatprep.subr.bf16.mxu0 0
        %1063 = vmatpush1.bf16.msra.mxu0 0
        %1064 = vmatprep.subr.bf16.mxu0 0
        %1065 = vmatpush1.bf16.msra.mxu0 0
        %1066 = vmatprep.subr.bf16.mxu0 0
        %1067 = vmatpush1.bf16.msra.mxu0 0
        %1068 = vmatprep.subr.bf16.mxu0 0
        %1069 = vmatpush1.bf16.msra.mxu0 0
        %1070 = vmatprep.subr.bf16.mxu0 0
        %1071 = vmatpush1.bf16.msra.mxu0 0
        %1072 = vmatprep.subr.bf16.mxu0 0
        %1073 = vmatpush1.bf16.msra.mxu0 0
        %1074 = vmatprep.mubr.bf16.mxu0 0
        %1075 = vmatmul.mubr.bf16.gmra.mrb[0].mxu0 %v1007
        %v1076 = vpop.f32.mrb[0].mxu0
        %v1077 = vadd.f32 0.0, %v1076
        %v1078 = vpop.f32.mrb[0].mxu0
        %v1079 = vpop.f32.mrb[0].mxu0
        %v1080 = vadd.f32 0.0, %v1079
        %v1081 = vpop.f32.mrb[0].mxu0
        %1082 = vmatprep.mubr.bf16.mxu0 0
        %1083 = vmatmul.mubr.bf16.gmra.mrb[0].mxu0 %v1010
        %v1084 = vpop.f32.mrb[0].mxu0
        %v1085 = vpop.f32.mrb[0].mxu0
        %v1086 = vpop.f32.mrb[0].mxu0
        %v1087 = vadd.f32 0.0, %v1086
        %v1088 = vpop.f32.mrb[0].mxu0
        %1089 = vmatprep.mubr.bf16.mxu0 0
        %1090 = vmatmul.mubr.bf16.gmra.mrb[0].mxu0 %v1013
        %v1091 = vpop.f32.mrb[0].mxu0
        %v1092 = vadd.f32 0.0, %v1091
        %v1093 = vpop.f32.mrb[0].mxu0
        %v1094 = vpop.f32.mrb[0].mxu0
        %v1095 = vpop.f32.mrb[0].mxu0
        %1096 = vmatprep.mubr.bf16.mxu0 0
        %1097 = vmatmul.mubr.bf16.gmra.mrb[0].mxu0 %v1016
        %v1098 = vpop.f32.mrb[0].mxu0
        %v1099 = vadd.f32 0.0, %v1098
        %v1100 = vpop.f32.mrb[0].mxu0
        %v1101 = vpop.f32.mrb[0].mxu0
        %v1102 = vadd.f32 0.0, %v1101
        %v1103 = vpop.f32.mrb[0].mxu0
        %1104 = vmatprep.mubr.bf16.mxu0 0
        %1105 = vmatmul.mubr.bf16.gmra.mrb[0].mxu0 %v1019
        %v1106 = vpop.f32.mrb[0].mxu0
        %v1107 = vpop.f32.mrb[0].mxu0
        %v1108 = vpop.f32.mrb[0].mxu0
        %v1109 = vadd.f32 0.0, %v1108
        %v1110 = vpop.f32.mrb[0].mxu0
        %1111 = vmatprep.mubr.bf16.mxu0 0
        %1112 = vmatmul.mubr.bf16.gmra.mrb[0].mxu0 %v1022
        %v1113 = vpop.f32.mrb[0].mxu0
        %v1114 = vadd.f32 0.0, %v1113
        %v1115 = vpop.f32.mrb[0].mxu0
        %v1116 = vpop.f32.mrb[0].mxu0
        %v1117 = vpop.f32.mrb[0].mxu0
        %1118 = vmatprep.mubr.bf16.mxu0 0
        %1119 = vmatmul.mubr.bf16.gmra.mrb[0].mxu0 %v1025
        %v1120 = vpop.f32.mrb[0].mxu0
        %v1121 = vadd.f32 0.0, %v1120
        %v1122 = vpop.f32.mrb[0].mxu0
        %v1123 = vpop.f32.mrb[0].mxu0
        %v1124 = vadd.f32 0.0, %v1123
        %v1125 = vpop.f32.mrb[0].mxu0
        %1126 = vmatprep.mubr.bf16.mxu0 0
        %1127 = vmatmul.mubr.bf16.gmra.mrb[0].mxu0 %v1028
        %v1128 = vpop.f32.mrb[0].mxu0
        %v1129 = vpop.f32.mrb[0].mxu0
        %v1130 = vpop.f32.mrb[0].mxu0
        %v1131 = vadd.f32 0.0, %v1130
        %v1132 = vpop.f32.mrb[0].mxu0
        %1133 = vmatprep.mubr.bf16.mxu0 0
        %1134 = vmatmul.mubr.bf16.gmra.mrb[0].mxu0 %v1031
        %v1135 = vpop.f32.mrb[0].mxu0
        %v1136 = vadd.f32 0.0, %v1135
        %v1137 = vpop.f32.mrb[0].mxu0
        %v1138 = vpop.f32.mrb[0].mxu0
        %v1139 = vpop.f32.mrb[0].mxu0
        %1140 = vmatprep.mubr.bf16.mxu0 0
        %1141 = vmatmul.mubr.bf16.gmra.mrb[0].mxu0 %v1034
        %v1142 = vpop.f32.mrb[0].mxu0
        %v1143 = vadd.f32 0.0, %v1142
        %v1144 = vpop.f32.mrb[0].mxu0
        %v1145 = vpop.f32.mrb[0].mxu0
        %v1146 = vadd.f32 0.0, %v1145
        %v1147 = vpop.f32.mrb[0].mxu0
        %1148 = vmatprep.mubr.bf16.mxu0 0
        %1149 = vmatmul.mubr.bf16.gmra.mrb[0].mxu0 %v1037
        %v1150 = vpop.f32.mrb[0].mxu0
        %v1151 = vpop.f32.mrb[0].mxu0
        %v1152 = vpop.f32.mrb[0].mxu0
        %v1153 = vadd.f32 0.0, %v1152
        %v1154 = vpop.f32.mrb[0].mxu0
        %1155 = vmatprep.mubr.bf16.mxu0 0
        %1156 = vmatmul.mubr.bf16.gmra.mrb[0].mxu0 %v1040
        %v1157 = vpop.f32.mrb[0].mxu0
        %v1158 = vadd.f32 0.0, %v1157
        %v1159 = vpop.f32.mrb[0].mxu0
        %v1160 = vpop.f32.mrb[0].mxu0
        %v1161 = vpop.f32.mrb[0].mxu0
        %1162 = vdwg.mxu0
        %v1163 = vadd.f32 %v957, %v1077
        %v1164 = vadd.f32 %v958, %v1080
        %v1165 = vadd.f32 %v959, %v1087
        %v1166 = vadd.f32 %v960, %v1092
        %v1167 = vadd.f32 %v961, %v1099
        %v1168 = vadd.f32 %v962, %v1102
        %v1169 = vadd.f32 %v963, %v1109
        %v1170 = vadd.f32 %v964, %v1114
        %v1171 = vadd.f32 %v965, %v1121
        %v1172 = vadd.f32 %v966, %v1124
        %v1173 = vadd.f32 %v967, %v1131
        %v1174 = vadd.f32 %v968, %v1136
        %v1175 = vadd.f32 %v969, %v1143
        %v1176 = vadd.f32 %v970, %v1146
        %v1177 = vadd.f32 %v971, %v1153
        %v1178 = vadd.f32 %v972, %v1158
        %s1179 = scalar_lea.vmem %s1, 64
        %v1180 = vld [vmem:[%s1179] sm:$0xf]
        %v1181 = vld [vmem:[%s1179 + $0x4] sm:$0xf]
        %v1182 = vld [vmem:[%s1179 + $0x8] sm:$0xf]
        %v1183 = vld [vmem:[%s1179 + $0xc] sm:$0xf]
        %v1185 = vunpack.c.l.b16 %v253
        %v1186 = vpack.c.b16 %v1185, %v1185
        %v1187 = vshrl.u32 %v982, 16
        %v1189 = vshll.u32 %v982, 16
        %v1191 = vrot.slane %v1189, 1
        %v1192 = vor.u32 %v1187, %v1191
        %v1193 = vshll.u32 %v983, 16
        %v1195 = vrot.slane %v1193, 1
        %v1196 = vsel %vm329, %v1192, %v1195
        %v1197 = vshrl.u32 %v983, 16
        %v1199 = vor.u32 %v1197, %v1195
        %v1200 = vshll.u32 %v984, 16
        %v1202 = vrot.slane %v1200, 1
        %v1203 = vsel %vm329, %v1199, %v1202
        %v1204 = vshrl.u32 %v984, 16
        %v1206 = vor.u32 %v1204, %v1202
        %v1207 = vshll.u32 %v985, 16
        %v1209 = vrot.slane %v1207, 1
        %v1210 = vsel %vm329, %v1206, %v1209
        %v1211 = vshrl.u32 %v985, 16
        %v1213 = vor.u32 %v1211, %v1209
        %v1214 = vshll.u32 %v986, 16
        %v1216 = vrot.slane %v1214, 1
        %v1217 = vsel %vm329, %v1213, %v1216
        %v1218 = vshrl.u32 %v986, 16
        %v1220 = vor.u32 %v1218, %v1216
        %v1221 = vshll.u32 %v987, 16
        %v1223 = vrot.slane %v1221, 1
        %v1224 = vsel %vm329, %v1220, %v1223
        %v1225 = vshrl.u32 %v987, 16
        %v1227 = vor.u32 %v1225, %v1223
        %v1228 = vshll.u32 %v988, 16
        %v1230 = vrot.slane %v1228, 1
        %v1231 = vsel %vm329, %v1227, %v1230
        %v1232 = vshrl.u32 %v988, 16
        %v1234 = vor.u32 %v1232, %v1230
        %v1235 = vshll.u32 %v989, 16
        %v1237 = vrot.slane %v1235, 1
        %v1238 = vsel %vm329, %v1234, %v1237
        %v1239 = vshrl.u32 %v989, 16
        %v1241 = vor.u32 %v1239, %v1237
        %v1242 = vshll.u32 %v990, 16
        %v1244 = vrot.slane %v1242, 1
        %v1245 = vsel %vm329, %v1241, %v1244
        %v1246 = vshrl.u32 %v990, 16
        %v1248 = vor.u32 %v1246, %v1244
        %v1249 = vshll.u32 %v991, 16
        %v1251 = vrot.slane %v1249, 1
        %v1252 = vsel %vm329, %v1248, %v1251
        %v1253 = vshrl.u32 %v991, 16
        %v1255 = vor.u32 %v1253, %v1251
        %v1256 = vshll.u32 %v992, 16
        %v1258 = vrot.slane %v1256, 1
        %v1259 = vsel %vm329, %v1255, %v1258
        %v1260 = vshrl.u32 %v992, 16
        %v1262 = vor.u32 %v1260, %v1258
        %v1263 = vshll.u32 %v993, 16
        %v1265 = vrot.slane %v1263, 1
        %v1266 = vsel %vm329, %v1262, %v1265
        %v1267 = vshrl.u32 %v993, 16
        %v1269 = vor.u32 %v1267, %v1265
        %v1271 = vshll.u32 %v1186, 16
        %v1273 = vrot.slane %v1271, 1
        %v1274 = vsel %vm329, %v1269, %v1273
        %v1279 = vunpack.c.l.b16 %v1180
        %v1280 = vunpack.c.l.b16 %v1181
        %v1281 = vunpack.c.l.b16 %v1182
        %v1282 = vunpack.c.l.b16 %v1183
        %v1283 = vpack.c.b16 %v1280, %v1279
        %v1284 = vpack.c.b16 %v1282, %v1281
        %v1288 = vsel %vm442, %v1196, 0
        %v1291 = vsel %vm442, %v1203, 0
        %v1294 = vsel %vm442, %v1210, 0
        %v1297 = vsel %vm442, %v1217, 0
        %v1300 = vsel %vm442, %v1224, 0
        %v1303 = vsel %vm442, %v1231, 0
        %v1306 = vsel %vm442, %v1238, 0
        %v1309 = vsel %vm442, %v1245, 0
        %v1312 = vsel %vm442, %v1252, 0
        %v1315 = vsel %vm442, %v1259, 0
        %v1318 = vsel %vm442, %v1266, 0
        %v1321 = vsel %vm442, %v1274, 0
        %1323 = vmatprep.subr.bf16.mxu0 0
        %1324 = vmatpush1.bf16.msra.mxu0 %v1283
        %1325 = vmatprep.subr.bf16.mxu0 0
        %1326 = vmatpush1.bf16.msra.mxu0 %v1284
        %1327 = vmatprep.subr.bf16.mxu0 0
        %1328 = vmatpush1.bf16.msra.mxu0 0
        %1329 = vmatprep.subr.bf16.mxu0 0
        %1330 = vmatpush1.bf16.msra.mxu0 0
        %1331 = vmatprep.subr.bf16.mxu0 0
        %1332 = vmatpush1.bf16.msra.mxu0 0
        %1333 = vmatprep.subr.bf16.mxu0 0
        %1334 = vmatpush1.bf16.msra.mxu0 0
        %1335 = vmatprep.subr.bf16.mxu0 0
        %1336 = vmatpush1.bf16.msra.mxu0 0
        %1337 = vmatprep.subr.bf16.mxu0 0
        %1338 = vmatpush1.bf16.msra.mxu0 0
        %1339 = vmatprep.subr.bf16.mxu0 0
        %1340 = vmatpush1.bf16.msra.mxu0 0
        %1341 = vmatprep.subr.bf16.mxu0 0
        %1342 = vmatpush1.bf16.msra.mxu0 0
        %1343 = vmatprep.subr.bf16.mxu0 0
        %1344 = vmatpush1.bf16.msra.mxu0 0
        %1345 = vmatprep.subr.bf16.mxu0 0
        %1346 = vmatpush1.bf16.msra.mxu0 0
        %1347 = vmatprep.subr.bf16.mxu0 0
        %1348 = vmatpush1.bf16.msra.mxu0 0
        %1349 = vmatprep.subr.bf16.mxu0 0
        %1350 = vmatpush1.bf16.msra.mxu0 0
        %1351 = vmatprep.subr.bf16.mxu0 0
        %1352 = vmatpush1.bf16.msra.mxu0 0
        %1353 = vmatprep.subr.bf16.mxu0 0
        %1354 = vmatpush1.bf16.msra.mxu0 0
        %1355 = vmatprep.mubr.bf16.mxu0 0
        %1356 = vmatmul.mubr.bf16.gmra.mrb[0].mxu0 %v1288
        %v1357 = vpop.f32.mrb[0].mxu0
        %v1358 = vadd.f32 0.0, %v1357
        %v1359 = vpop.f32.mrb[0].mxu0
        %v1360 = vpop.f32.mrb[0].mxu0
        %v1361 = vadd.f32 0.0, %v1360
        %v1362 = vpop.f32.mrb[0].mxu0
        %1363 = vmatprep.mubr.bf16.mxu0 0
        %1364 = vmatmul.mubr.bf16.gmra.mrb[0].mxu0 %v1291
        %v1365 = vpop.f32.mrb[0].mxu0
        %v1366 = vpop.f32.mrb[0].mxu0
        %v1367 = vpop.f32.mrb[0].mxu0
        %v1368 = vadd.f32 0.0, %v1367
        %v1369 = vpop.f32.mrb[0].mxu0
        %1370 = vmatprep.mubr.bf16.mxu0 0
        %1371 = vmatmul.mubr.bf16.gmra.mrb[0].mxu0 %v1294
        %v1372 = vpop.f32.mrb[0].mxu0
        %v1373 = vadd.f32 0.0, %v1372
        %v1374 = vpop.f32.mrb[0].mxu0
        %v1375 = vpop.f32.mrb[0].mxu0
        %v1376 = vpop.f32.mrb[0].mxu0
        %1377 = vmatprep.mubr.bf16.mxu0 0
        %1378 = vmatmul.mubr.bf16.gmra.mrb[0].mxu0 %v1297
        %v1379 = vpop.f32.mrb[0].mxu0
        %v1380 = vadd.f32 0.0, %v1379
        %v1381 = vpop.f32.mrb[0].mxu0
        %v1382 = vpop.f32.mrb[0].mxu0
        %v1383 = vadd.f32 0.0, %v1382
        %v1384 = vpop.f32.mrb[0].mxu0
        %1385 = vmatprep.mubr.bf16.mxu0 0
        %1386 = vmatmul.mubr.bf16.gmra.mrb[0].mxu0 %v1300
        %v1387 = vpop.f32.mrb[0].mxu0
        %v1388 = vpop.f32.mrb[0].mxu0
        %v1389 = vpop.f32.mrb[0].mxu0
        %v1390 = vadd.f32 0.0, %v1389
        %v1391 = vpop.f32.mrb[0].mxu0
        %1392 = vmatprep.mubr.bf16.mxu0 0
        %1393 = vmatmul.mubr.bf16.gmra.mrb[0].mxu0 %v1303
        %v1394 = vpop.f32.mrb[0].mxu0
        %v1395 = vadd.f32 0.0, %v1394
        %v1396 = vpop.f32.mrb[0].mxu0
        %v1397 = vpop.f32.mrb[0].mxu0
        %v1398 = vpop.f32.mrb[0].mxu0
        %1399 = vmatprep.mubr.bf16.mxu0 0
        %1400 = vmatmul.mubr.bf16.gmra.mrb[0].mxu0 %v1306
        %v1401 = vpop.f32.mrb[0].mxu0
        %v1402 = vadd.f32 0.0, %v1401
        %v1403 = vpop.f32.mrb[0].mxu0
        %v1404 = vpop.f32.mrb[0].mxu0
        %v1405 = vadd.f32 0.0, %v1404
        %v1406 = vpop.f32.mrb[0].mxu0
        %1407 = vmatprep.mubr.bf16.mxu0 0
        %1408 = vmatmul.mubr.bf16.gmra.mrb[0].mxu0 %v1309
        %v1409 = vpop.f32.mrb[0].mxu0
        %v1410 = vpop.f32.mrb[0].mxu0
        %v1411 = vpop.f32.mrb[0].mxu0
        %v1412 = vadd.f32 0.0, %v1411
        %v1413 = vpop.f32.mrb[0].mxu0
        %1414 = vmatprep.mubr.bf16.mxu0 0
        %1415 = vmatmul.mubr.bf16.gmra.mrb[0].mxu0 %v1312
        %v1416 = vpop.f32.mrb[0].mxu0
        %v1417 = vadd.f32 0.0, %v1416
        %v1418 = vpop.f32.mrb[0].mxu0
        %v1419 = vpop.f32.mrb[0].mxu0
        %v1420 = vpop.f32.mrb[0].mxu0
        %1421 = vmatprep.mubr.bf16.mxu0 0
        %1422 = vmatmul.mubr.bf16.gmra.mrb[0].mxu0 %v1315
        %v1423 = vpop.f32.mrb[0].mxu0
        %v1424 = vadd.f32 0.0, %v1423
        %v1425 = vpop.f32.mrb[0].mxu0
        %v1426 = vpop.f32.mrb[0].mxu0
        %v1427 = vadd.f32 0.0, %v1426
        %v1428 = vpop.f32.mrb[0].mxu0
        %1429 = vmatprep.mubr.bf16.mxu0 0
        %1430 = vmatmul.mubr.bf16.gmra.mrb[0].mxu0 %v1318
        %v1431 = vpop.f32.mrb[0].mxu0
        %v1432 = vpop.f32.mrb[0].mxu0
        %v1433 = vpop.f32.mrb[0].mxu0
        %v1434 = vadd.f32 0.0, %v1433
        %v1435 = vpop.f32.mrb[0].mxu0
        %1436 = vmatprep.mubr.bf16.mxu0 0
        %1437 = vmatmul.mubr.bf16.gmra.mrb[0].mxu0 %v1321
        %v1438 = vpop.f32.mrb[0].mxu0
        %v1439 = vadd.f32 0.0, %v1438
        %v1440 = vpop.f32.mrb[0].mxu0
        %v1441 = vpop.f32.mrb[0].mxu0
        %v1442 = vpop.f32.mrb[0].mxu0
        %1443 = vdwg.mxu0
        %v1444 = vadd.f32 %v1163, %v1358
        %v1445 = vadd.f32 %v1164, %v1361
        %v1446 = vadd.f32 %v1165, %v1368
        %v1447 = vadd.f32 %v1166, %v1373
        %v1448 = vadd.f32 %v1167, %v1380
        %v1449 = vadd.f32 %v1168, %v1383
        %v1450 = vadd.f32 %v1169, %v1390
        %v1451 = vadd.f32 %v1170, %v1395
        %v1452 = vadd.f32 %v1171, %v1402
        %v1453 = vadd.f32 %v1172, %v1405
        %v1454 = vadd.f32 %v1173, %v1412
        %v1455 = vadd.f32 %v1174, %v1417
        %v1456 = vadd.f32 %v1175, %v1424
        %v1457 = vadd.f32 %v1176, %v1427
        %v1458 = vadd.f32 %v1177, %v1434
        %v1459 = vadd.f32 %v1178, %v1439
        %s1460 = scalar_lea.vmem %s1, 80
        %v1461 = vld [vmem:[%s1460] sm:$0xf]
        %v1462 = vld [vmem:[%s1460 + $0x4] sm:$0xf]
        %v1463 = vld [vmem:[%s1460 + $0x8] sm:$0xf]
        %v1464 = vld [vmem:[%s1460 + $0xc] sm:$0xf]
        %v1465 = vrot.slane %v982, 1
        %v1466 = vrot.slane %v983, 1
        %v1467 = vsel %vm762, %v1465, %v1466
        %v1468 = vrot.slane %v984, 1
        %v1469 = vsel %vm762, %v1466, %v1468
        %v1470 = vrot.slane %v985, 1
        %v1471 = vsel %vm762, %v1468, %v1470
        %v1472 = vrot.slane %v986, 1
        %v1473 = vsel %vm762, %v1470, %v1472
        %v1474 = vrot.slane %v987, 1
        %v1475 = vsel %vm762, %v1472, %v1474
        %v1476 = vrot.slane %v988, 1
        %v1477 = vsel %vm762, %v1474, %v1476
        %v1478 = vrot.slane %v989, 1
        %v1479 = vsel %vm762, %v1476, %v1478
        %v1480 = vrot.slane %v990, 1
        %v1481 = vsel %vm762, %v1478, %v1480
        %v1482 = vrot.slane %v991, 1
        %v1483 = vsel %vm762, %v1480, %v1482
        %v1484 = vrot.slane %v992, 1
        %v1485 = vsel %vm762, %v1482, %v1484
        %v1486 = vrot.slane %v993, 1
        %v1487 = vsel %vm762, %v1484, %v1486
        %v1488 = vrot.slane %v1186, 1
        %v1489 = vsel %vm762, %v1486, %v1488
        %v1494 = vunpack.c.l.b16 %v1461
        %v1495 = vunpack.c.l.b16 %v1462
        %v1496 = vunpack.c.l.b16 %v1463
        %v1497 = vunpack.c.l.b16 %v1464
        %v1498 = vpack.c.b16 %v1495, %v1494
        %v1499 = vpack.c.b16 %v1497, %v1496
        %v1503 = vsel %vm442, %v1467, 0
        %v1506 = vsel %vm442, %v1469, 0
        %v1509 = vsel %vm442, %v1471, 0
        %v1512 = vsel %vm442, %v1473, 0
        %v1515 = vsel %vm442, %v1475, 0
        %v1518 = vsel %vm442, %v1477, 0
        %v1521 = vsel %vm442, %v1479, 0
        %v1524 = vsel %vm442, %v1481, 0
        %v1527 = vsel %vm442, %v1483, 0
        %v1530 = vsel %vm442, %v1485, 0
        %v1533 = vsel %vm442, %v1487, 0
        %v1536 = vsel %vm442, %v1489, 0
        %1538 = vmatprep.subr.bf16.mxu0 0
        %1539 = vmatpush1.bf16.msra.mxu0 %v1498
        %1540 = vmatprep.subr.bf16.mxu0 0
        %1541 = vmatpush1.bf16.msra.mxu0 %v1499
        %1542 = vmatprep.subr.bf16.mxu0 0
        %1543 = vmatpush1.bf16.msra.mxu0 0
        %1544 = vmatprep.subr.bf16.mxu0 0
        %1545 = vmatpush1.bf16.msra.mxu0 0
        %1546 = vmatprep.subr.bf16.mxu0 0
        %1547 = vmatpush1.bf16.msra.mxu0 0
        %1548 = vmatprep.subr.bf16.mxu0 0
        %1549 = vmatpush1.bf16.msra.mxu0 0
        %1550 = vmatprep.subr.bf16.mxu0 0
        %1551 = vmatpush1.bf16.msra.mxu0 0
        %1552 = vmatprep.subr.bf16.mxu0 0
        %1553 = vmatpush1.bf16.msra.mxu0 0
        %1554 = vmatprep.subr.bf16.mxu0 0
        %1555 = vmatpush1.bf16.msra.mxu0 0
        %1556 = vmatprep.subr.bf16.mxu0 0
        %1557 = vmatpush1.bf16.msra.mxu0 0
        %1558 = vmatprep.subr.bf16.mxu0 0
        %1559 = vmatpush1.bf16.msra.mxu0 0
        %1560 = vmatprep.subr.bf16.mxu0 0
        %1561 = vmatpush1.bf16.msra.mxu0 0
        %1562 = vmatprep.subr.bf16.mxu0 0
        %1563 = vmatpush1.bf16.msra.mxu0 0
        %1564 = vmatprep.subr.bf16.mxu0 0
        %1565 = vmatpush1.bf16.msra.mxu0 0
        %1566 = vmatprep.subr.bf16.mxu0 0
        %1567 = vmatpush1.bf16.msra.mxu0 0
        %1568 = vmatprep.subr.bf16.mxu0 0
        %1569 = vmatpush1.bf16.msra.mxu0 0
        %1570 = vmatprep.mubr.bf16.mxu0 0
        %1571 = vmatmul.mubr.bf16.gmra.mrb[0].mxu0 %v1503
        %v1572 = vpop.f32.mrb[0].mxu0
        %v1573 = vadd.f32 0.0, %v1572
        %v1574 = vpop.f32.mrb[0].mxu0
        %v1575 = vpop.f32.mrb[0].mxu0
        %v1576 = vadd.f32 0.0, %v1575
        %v1577 = vpop.f32.mrb[0].mxu0
        %1578 = vmatprep.mubr.bf16.mxu0 0
        %1579 = vmatmul.mubr.bf16.gmra.mrb[0].mxu0 %v1506
        %v1580 = vpop.f32.mrb[0].mxu0
        %v1581 = vpop.f32.mrb[0].mxu0
        %v1582 = vpop.f32.mrb[0].mxu0
        %v1583 = vadd.f32 0.0, %v1582
        %v1584 = vpop.f32.mrb[0].mxu0
        %1585 = vmatprep.mubr.bf16.mxu0 0
        %1586 = vmatmul.mubr.bf16.gmra.mrb[0].mxu0 %v1509
        %v1587 = vpop.f32.mrb[0].mxu0
        %v1588 = vadd.f32 0.0, %v1587
        %v1589 = vpop.f32.mrb[0].mxu0
        %v1590 = vpop.f32.mrb[0].mxu0
        %v1591 = vpop.f32.mrb[0].mxu0
        %1592 = vmatprep.mubr.bf16.mxu0 0
        %1593 = vmatmul.mubr.bf16.gmra.mrb[0].mxu0 %v1512
        %v1594 = vpop.f32.mrb[0].mxu0
        %v1595 = vadd.f32 0.0, %v1594
        %v1596 = vpop.f32.mrb[0].mxu0
        %v1597 = vpop.f32.mrb[0].mxu0
        %v1598 = vadd.f32 0.0, %v1597
        %v1599 = vpop.f32.mrb[0].mxu0
        %1600 = vmatprep.mubr.bf16.mxu0 0
        %1601 = vmatmul.mubr.bf16.gmra.mrb[0].mxu0 %v1515
        %v1602 = vpop.f32.mrb[0].mxu0
        %v1603 = vpop.f32.mrb[0].mxu0
        %v1604 = vpop.f32.mrb[0].mxu0
        %v1605 = vadd.f32 0.0, %v1604
        %v1606 = vpop.f32.mrb[0].mxu0
        %1607 = vmatprep.mubr.bf16.mxu0 0
        %1608 = vmatmul.mubr.bf16.gmra.mrb[0].mxu0 %v1518
        %v1609 = vpop.f32.mrb[0].mxu0
        %v1610 = vadd.f32 0.0, %v1609
        %v1611 = vpop.f32.mrb[0].mxu0
        %v1612 = vpop.f32.mrb[0].mxu0
        %v1613 = vpop.f32.mrb[0].mxu0
        %1614 = vmatprep.mubr.bf16.mxu0 0
        %1615 = vmatmul.mubr.bf16.gmra.mrb[0].mxu0 %v1521
        %v1616 = vpop.f32.mrb[0].mxu0
        %v1617 = vadd.f32 0.0, %v1616
        %v1618 = vpop.f32.mrb[0].mxu0
        %v1619 = vpop.f32.mrb[0].mxu0
        %v1620 = vadd.f32 0.0, %v1619
        %v1621 = vpop.f32.mrb[0].mxu0
        %1622 = vmatprep.mubr.bf16.mxu0 0
        %1623 = vmatmul.mubr.bf16.gmra.mrb[0].mxu0 %v1524
        %v1624 = vpop.f32.mrb[0].mxu0
        %v1625 = vpop.f32.mrb[0].mxu0
        %v1626 = vpop.f32.mrb[0].mxu0
        %v1627 = vadd.f32 0.0, %v1626
        %v1628 = vpop.f32.mrb[0].mxu0
        %1629 = vmatprep.mubr.bf16.mxu0 0
        %1630 = vmatmul.mubr.bf16.gmra.mrb[0].mxu0 %v1527
        %v1631 = vpop.f32.mrb[0].mxu0
        %v1632 = vadd.f32 0.0, %v1631
        %v1633 = vpop.f32.mrb[0].mxu0
        %v1634 = vpop.f32.mrb[0].mxu0
        %v1635 = vpop.f32.mrb[0].mxu0
        %1636 = vmatprep.mubr.bf16.mxu0 0
        %1637 = vmatmul.mubr.bf16.gmra.mrb[0].mxu0 %v1530
        %v1638 = vpop.f32.mrb[0].mxu0
        %v1639 = vadd.f32 0.0, %v1638
        %v1640 = vpop.f32.mrb[0].mxu0
        %v1641 = vpop.f32.mrb[0].mxu0
        %v1642 = vadd.f32 0.0, %v1641
        %v1643 = vpop.f32.mrb[0].mxu0
        %1644 = vmatprep.mubr.bf16.mxu0 0
        %1645 = vmatmul.mubr.bf16.gmra.mrb[0].mxu0 %v1533
        %v1646 = vpop.f32.mrb[0].mxu0
        %v1647 = vpop.f32.mrb[0].mxu0
        %v1648 = vpop.f32.mrb[0].mxu0
        %v1649 = vadd.f32 0.0, %v1648
        %v1650 = vpop.f32.mrb[0].mxu0
        %1651 = vmatprep.mubr.bf16.mxu0 0
        %1652 = vmatmul.mubr.bf16.gmra.mrb[0].mxu0 %v1536
        %v1653 = vpop.f32.mrb[0].mxu0
        %v1654 = vadd.f32 0.0, %v1653
        %v1655 = vpop.f32.mrb[0].mxu0
        %v1656 = vpop.f32.mrb[0].mxu0
        %v1657 = vpop.f32.mrb[0].mxu0
        %1658 = vdwg.mxu0
        %v1659 = vadd.f32 %v1444, %v1573
        %v1660 = vadd.f32 %v1445, %v1576
        %v1661 = vadd.f32 %v1446, %v1583
        %v1662 = vadd.f32 %v1447, %v1588
        %v1663 = vadd.f32 %v1448, %v1595
        %v1664 = vadd.f32 %v1449, %v1598
        %v1665 = vadd.f32 %v1450, %v1605
        %v1666 = vadd.f32 %v1451, %v1610
        %v1667 = vadd.f32 %v1452, %v1617
        %v1668 = vadd.f32 %v1453, %v1620
        %v1669 = vadd.f32 %v1454, %v1627
        %v1670 = vadd.f32 %v1455, %v1632
        %v1671 = vadd.f32 %v1456, %v1639
        %v1672 = vadd.f32 %v1457, %v1642
        %v1673 = vadd.f32 %v1458, %v1649
        %v1674 = vadd.f32 %v1459, %v1654
        %s1675 = scalar_lea.vmem %s1, 96
        %v1676 = vld [vmem:[%s1675] sm:$0xf]
        %v1677 = vld [vmem:[%s1675 + $0x4] sm:$0xf]
        %v1678 = vld [vmem:[%s1675 + $0x8] sm:$0xf]
        %v1679 = vld [vmem:[%s1675 + $0xc] sm:$0xf]
        %v1682 = vunpack.c.l.b16 %v254
        %v1683 = vunpack.c.l.b16 %v255
        %v1684 = vpack.c.b16 %v980, %v315
        %v1685 = vpack.c.b16 %v1185, %v981
        %v1686 = vpack.c.b16 %v1683, %v1682
        %v1691 = vunpack.c.l.b16 %v1676
        %v1692 = vunpack.c.l.b16 %v1677
        %v1693 = vunpack.c.l.b16 %v1678
        %v1694 = vunpack.c.l.b16 %v1679
        %v1695 = vpack.c.b16 %v1692, %v1691
        %v1696 = vpack.c.b16 %v1694, %v1693
        %v1700 = vsel %vm442, %v1684, 0
        %v1703 = vsel %vm442, %v1685, 0
        %v1706 = vsel %vm442, %v1686, 0
        %1708 = vmatprep.subr.bf16.mxu0 0
        %1709 = vmatpush1.bf16.msra.mxu0 %v1695
        %1710 = vmatprep.subr.bf16.mxu0 0
        %1711 = vmatpush1.bf16.msra.mxu0 %v1696
        %1712 = vmatprep.subr.bf16.mxu0 0
        %1713 = vmatpush1.bf16.msra.mxu0 0
        %1714 = vmatprep.subr.bf16.mxu0 0
        %1715 = vmatpush1.bf16.msra.mxu0 0
        %1716 = vmatprep.subr.bf16.mxu0 0
        %1717 = vmatpush1.bf16.msra.mxu0 0
        %1718 = vmatprep.subr.bf16.mxu0 0
        %1719 = vmatpush1.bf16.msra.mxu0 0
        %1720 = vmatprep.subr.bf16.mxu0 0
        %1721 = vmatpush1.bf16.msra.mxu0 0
        %1722 = vmatprep.subr.bf16.mxu0 0
        %1723 = vmatpush1.bf16.msra.mxu0 0
        %1724 = vmatprep.subr.bf16.mxu0 0
        %1725 = vmatpush1.bf16.msra.mxu0 0
        %1726 = vmatprep.subr.bf16.mxu0 0
        %1727 = vmatpush1.bf16.msra.mxu0 0
        %1728 = vmatprep.subr.bf16.mxu0 0
        %1729 = vmatpush1.bf16.msra.mxu0 0
        %1730 = vmatprep.subr.bf16.mxu0 0
        %1731 = vmatpush1.bf16.msra.mxu0 0
        %1732 = vmatprep.subr.bf16.mxu0 0
        %1733 = vmatpush1.bf16.msra.mxu0 0
        %1734 = vmatprep.subr.bf16.mxu0 0
        %1735 = vmatpush1.bf16.msra.mxu0 0
        %1736 = vmatprep.subr.bf16.mxu0 0
        %1737 = vmatpush1.bf16.msra.mxu0 0
        %1738 = vmatprep.subr.bf16.mxu0 0
        %1739 = vmatpush1.bf16.msra.mxu0 0
        %1740 = vmatprep.mubr.bf16.mxu0 0
        %1741 = vmatmul.mubr.bf16.gmra.mrb[0].mxu0 %v618
        %v1742 = vpop.f32.mrb[0].mxu0
        %v1743 = vadd.f32 0.0, %v1742
        %v1744 = vpop.f32.mrb[0].mxu0
        %v1745 = vpop.f32.mrb[0].mxu0
        %v1746 = vadd.f32 0.0, %v1745
        %v1747 = vpop.f32.mrb[0].mxu0
        %1748 = vmatprep.mubr.bf16.mxu0 0
        %1749 = vmatmul.mubr.bf16.gmra.mrb[0].mxu0 %v620
        %v1750 = vpop.f32.mrb[0].mxu0
        %v1751 = vpop.f32.mrb[0].mxu0
        %v1752 = vpop.f32.mrb[0].mxu0
        %v1753 = vadd.f32 0.0, %v1752
        %v1754 = vpop.f32.mrb[0].mxu0
        %1755 = vmatprep.mubr.bf16.mxu0 0
        %1756 = vmatmul.mubr.bf16.gmra.mrb[0].mxu0 %v622
        %v1757 = vpop.f32.mrb[0].mxu0
        %v1758 = vadd.f32 0.0, %v1757
        %v1759 = vpop.f32.mrb[0].mxu0
        %v1760 = vpop.f32.mrb[0].mxu0
        %v1761 = vpop.f32.mrb[0].mxu0
        %1762 = vmatprep.mubr.bf16.mxu0 0
        %1763 = vmatmul.mubr.bf16.gmra.mrb[0].mxu0 %v624
        %v1764 = vpop.f32.mrb[0].mxu0
        %v1765 = vadd.f32 0.0, %v1764
        %v1766 = vpop.f32.mrb[0].mxu0
        %v1767 = vpop.f32.mrb[0].mxu0
        %v1768 = vadd.f32 0.0, %v1767
        %v1769 = vpop.f32.mrb[0].mxu0
        %1770 = vmatprep.mubr.bf16.mxu0 0
        %1771 = vmatmul.mubr.bf16.gmra.mrb[0].mxu0 %v626
        %v1772 = vpop.f32.mrb[0].mxu0
        %v1773 = vpop.f32.mrb[0].mxu0
        %v1774 = vpop.f32.mrb[0].mxu0
        %v1775 = vadd.f32 0.0, %v1774
        %v1776 = vpop.f32.mrb[0].mxu0
        %1777 = vmatprep.mubr.bf16.mxu0 0
        %1778 = vmatmul.mubr.bf16.gmra.mrb[0].mxu0 %v628
        %v1779 = vpop.f32.mrb[0].mxu0
        %v1780 = vadd.f32 0.0, %v1779
        %v1781 = vpop.f32.mrb[0].mxu0
        %v1782 = vpop.f32.mrb[0].mxu0
        %v1783 = vpop.f32.mrb[0].mxu0
        %1784 = vmatprep.mubr.bf16.mxu0 0
        %1785 = vmatmul.mubr.bf16.gmra.mrb[0].mxu0 %v630
        %v1786 = vpop.f32.mrb[0].mxu0
        %v1787 = vadd.f32 0.0, %v1786
        %v1788 = vpop.f32.mrb[0].mxu0
        %v1789 = vpop.f32.mrb[0].mxu0
        %v1790 = vadd.f32 0.0, %v1789
        %v1791 = vpop.f32.mrb[0].mxu0
        %1792 = vmatprep.mubr.bf16.mxu0 0
        %1793 = vmatmul.mubr.bf16.gmra.mrb[0].mxu0 %v632
        %v1794 = vpop.f32.mrb[0].mxu0
        %v1795 = vpop.f32.mrb[0].mxu0
        %v1796 = vpop.f32.mrb[0].mxu0
        %v1797 = vadd.f32 0.0, %v1796
        %v1798 = vpop.f32.mrb[0].mxu0
        %1799 = vmatprep.mubr.bf16.mxu0 0
        %1800 = vmatmul.mubr.bf16.gmra.mrb[0].mxu0 %v634
        %v1801 = vpop.f32.mrb[0].mxu0
        %v1802 = vadd.f32 0.0, %v1801
        %v1803 = vpop.f32.mrb[0].mxu0
        %v1804 = vpop.f32.mrb[0].mxu0
        %v1805 = vpop.f32.mrb[0].mxu0
        %1806 = vmatprep.mubr.bf16.mxu0 0
        %1807 = vmatmul.mubr.bf16.gmra.mrb[0].mxu0 %v1700
        %v1808 = vpop.f32.mrb[0].mxu0
        %v1809 = vadd.f32 0.0, %v1808
        %v1810 = vpop.f32.mrb[0].mxu0
        %v1811 = vpop.f32.mrb[0].mxu0
        %v1812 = vadd.f32 0.0, %v1811
        %v1813 = vpop.f32.mrb[0].mxu0
        %1814 = vmatprep.mubr.bf16.mxu0 0
        %1815 = vmatmul.mubr.bf16.gmra.mrb[0].mxu0 %v1703
        %v1816 = vpop.f32.mrb[0].mxu0
        %v1817 = vpop.f32.mrb[0].mxu0
        %v1818 = vpop.f32.mrb[0].mxu0
        %v1819 = vadd.f32 0.0, %v1818
        %v1820 = vpop.f32.mrb[0].mxu0
        %1821 = vmatprep.mubr.bf16.mxu0 0
        %1822 = vmatmul.mubr.bf16.gmra.mrb[0].mxu0 %v1706
        %v1823 = vpop.f32.mrb[0].mxu0
        %v1824 = vadd.f32 0.0, %v1823
        %v1825 = vpop.f32.mrb[0].mxu0
        %v1826 = vpop.f32.mrb[0].mxu0
        %v1827 = vpop.f32.mrb[0].mxu0
        %1828 = vdwg.mxu0
        %v1829 = vadd.f32 %v1659, %v1743
        %v1830 = vadd.f32 %v1660, %v1746
        %v1831 = vadd.f32 %v1661, %v1753
        %v1832 = vadd.f32 %v1662, %v1758
        %v1833 = vadd.f32 %v1663, %v1765
        %v1834 = vadd.f32 %v1664, %v1768
        %v1835 = vadd.f32 %v1665, %v1775
        %v1836 = vadd.f32 %v1666, %v1780
        %v1837 = vadd.f32 %v1667, %v1787
        %v1838 = vadd.f32 %v1668, %v1790
        %v1839 = vadd.f32 %v1669, %v1797
        %v1840 = vadd.f32 %v1670, %v1802
        %v1841 = vadd.f32 %v1671, %v1809
        %v1842 = vadd.f32 %v1672, %v1812
        %v1843 = vadd.f32 %v1673, %v1819
        %v1844 = vadd.f32 %v1674, %v1824
        %s1845 = scalar_lea.vmem %s1, 112
        %v1846 = vld [vmem:[%s1845] sm:$0xf]
        %v1847 = vld [vmem:[%s1845 + $0x4] sm:$0xf]
        %v1848 = vld [vmem:[%s1845 + $0x8] sm:$0xf]
        %v1849 = vld [vmem:[%s1845 + $0xc] sm:$0xf]
        %v1851 = vunpack.c.l.b16 %v256
        %v1852 = vpack.c.b16 %v1851, %v1851
        %v1853 = vshll.u32 %v1684, 16
        %v1855 = vrot.slane %v1853, 1
        %v1856 = vsel %vm329, %v424, %v1855
        %v1857 = vshrl.u32 %v1684, 16
        %v1859 = vor.u32 %v1857, %v1855
        %v1860 = vshll.u32 %v1685, 16
        %v1862 = vrot.slane %v1860, 1
        %v1863 = vsel %vm329, %v1859, %v1862
        %v1864 = vshrl.u32 %v1685, 16
        %v1866 = vor.u32 %v1864, %v1862
        %v1867 = vshll.u32 %v1686, 16
        %v1869 = vrot.slane %v1867, 1
        %v1870 = vsel %vm329, %v1866, %v1869
        %v1871 = vshrl.u32 %v1686, 16
        %v1873 = vor.u32 %v1871, %v1869
        %v1875 = vshll.u32 %v1852, 16
        %v1877 = vrot.slane %v1875, 1
        %v1878 = vsel %vm329, %v1873, %v1877
        %v1883 = vunpack.c.l.b16 %v1846
        %v1884 = vunpack.c.l.b16 %v1847
        %v1885 = vunpack.c.l.b16 %v1848
        %v1886 = vunpack.c.l.b16 %v1849
        %v1887 = vpack.c.b16 %v1884, %v1883
        %v1888 = vpack.c.b16 %v1886, %v1885
        %v1892 = vsel %vm442, %v1856, 0
        %v1895 = vsel %vm442, %v1863, 0
        %v1898 = vsel %vm442, %v1870, 0
        %v1901 = vsel %vm442, %v1878, 0
        %1903 = vmatprep.subr.bf16.mxu0 0
        %1904 = vmatpush1.bf16.msra.mxu0 %v1887
        %1905 = vmatprep.subr.bf16.mxu0 0
        %1906 = vmatpush1.bf16.msra.mxu0 %v1888
        %1907 = vmatprep.subr.bf16.mxu0 0
        %1908 = vmatpush1.bf16.msra.mxu0 0
        %1909 = vmatprep.subr.bf16.mxu0 0
        %1910 = vmatpush1.bf16.msra.mxu0 0
        %1911 = vmatprep.subr.bf16.mxu0 0
        %1912 = vmatpush1.bf16.msra.mxu0 0
        %1913 = vmatprep.subr.bf16.mxu0 0
        %1914 = vmatpush1.bf16.msra.mxu0 0
        %1915 = vmatprep.subr.bf16.mxu0 0
        %1916 = vmatpush1.bf16.msra.mxu0 0
        %1917 = vmatprep.subr.bf16.mxu0 0
        %1918 = vmatpush1.bf16.msra.mxu0 0
        %1919 = vmatprep.subr.bf16.mxu0 0
        %1920 = vmatpush1.bf16.msra.mxu0 0
        %1921 = vmatprep.subr.bf16.mxu0 0
        %1922 = vmatpush1.bf16.msra.mxu0 0
        %1923 = vmatprep.subr.bf16.mxu0 0
        %1924 = vmatpush1.bf16.msra.mxu0 0
        %1925 = vmatprep.subr.bf16.mxu0 0
        %1926 = vmatpush1.bf16.msra.mxu0 0
        %1927 = vmatprep.subr.bf16.mxu0 0
        %1928 = vmatpush1.bf16.msra.mxu0 0
        %1929 = vmatprep.subr.bf16.mxu0 0
        %1930 = vmatpush1.bf16.msra.mxu0 0
        %1931 = vmatprep.subr.bf16.mxu0 0
        %1932 = vmatpush1.bf16.msra.mxu0 0
        %1933 = vmatprep.subr.bf16.mxu0 0
        %1934 = vmatpush1.bf16.msra.mxu0 0
        %1935 = vmatprep.mubr.bf16.mxu0 0
        %1936 = vmatmul.mubr.bf16.gmra.mrb[0].mxu0 %v453
        %v1937 = vpop.f32.mrb[0].mxu0
        %v1938 = vadd.f32 0.0, %v1937
        %v1939 = vpop.f32.mrb[0].mxu0
        %v1940 = vpop.f32.mrb[0].mxu0
        %v1941 = vadd.f32 0.0, %v1940
        %v1942 = vpop.f32.mrb[0].mxu0
        %1943 = vmatprep.mubr.bf16.mxu0 0
        %1944 = vmatmul.mubr.bf16.gmra.mrb[0].mxu0 %v456
        %v1945 = vpop.f32.mrb[0].mxu0
        %v1946 = vpop.f32.mrb[0].mxu0
        %v1947 = vpop.f32.mrb[0].mxu0
        %v1948 = vadd.f32 0.0, %v1947
        %v1949 = vpop.f32.mrb[0].mxu0
        %1950 = vmatprep.mubr.bf16.mxu0 0
        %1951 = vmatmul.mubr.bf16.gmra.mrb[0].mxu0 %v459
        %v1952 = vpop.f32.mrb[0].mxu0
        %v1953 = vadd.f32 0.0, %v1952
        %v1954 = vpop.f32.mrb[0].mxu0
        %v1955 = vpop.f32.mrb[0].mxu0
        %v1956 = vpop.f32.mrb[0].mxu0
        %1957 = vmatprep.mubr.bf16.mxu0 0
        %1958 = vmatmul.mubr.bf16.gmra.mrb[0].mxu0 %v462
        %v1959 = vpop.f32.mrb[0].mxu0
        %v1960 = vadd.f32 0.0, %v1959
        %v1961 = vpop.f32.mrb[0].mxu0
        %v1962 = vpop.f32.mrb[0].mxu0
        %v1963 = vadd.f32 0.0, %v1962
        %v1964 = vpop.f32.mrb[0].mxu0
        %1965 = vmatprep.mubr.bf16.mxu0 0
        %1966 = vmatmul.mubr.bf16.gmra.mrb[0].mxu0 %v465
        %v1967 = vpop.f32.mrb[0].mxu0
        %v1968 = vpop.f32.mrb[0].mxu0
        %v1969 = vpop.f32.mrb[0].mxu0
        %v1970 = vadd.f32 0.0, %v1969
        %v1971 = vpop.f32.mrb[0].mxu0
        %1972 = vmatprep.mubr.bf16.mxu0 0
        %1973 = vmatmul.mubr.bf16.gmra.mrb[0].mxu0 %v468
        %v1974 = vpop.f32.mrb[0].mxu0
        %v1975 = vadd.f32 0.0, %v1974
        %v1976 = vpop.f32.mrb[0].mxu0
        %v1977 = vpop.f32.mrb[0].mxu0
        %v1978 = vpop.f32.mrb[0].mxu0
        %1979 = vmatprep.mubr.bf16.mxu0 0
        %1980 = vmatmul.mubr.bf16.gmra.mrb[0].mxu0 %v471
        %v1981 = vpop.f32.mrb[0].mxu0
        %v1982 = vadd.f32 0.0, %v1981
        %v1983 = vpop.f32.mrb[0].mxu0
        %v1984 = vpop.f32.mrb[0].mxu0
        %v1985 = vadd.f32 0.0, %v1984
        %v1986 = vpop.f32.mrb[0].mxu0
        %1987 = vmatprep.mubr.bf16.mxu0 0
        %1988 = vmatmul.mubr.bf16.gmra.mrb[0].mxu0 %v474
        %v1989 = vpop.f32.mrb[0].mxu0
        %v1990 = vpop.f32.mrb[0].mxu0
        %v1991 = vpop.f32.mrb[0].mxu0
        %v1992 = vadd.f32 0.0, %v1991
        %v1993 = vpop.f32.mrb[0].mxu0
        %1994 = vmatprep.mubr.bf16.mxu0 0
        %1995 = vmatmul.mubr.bf16.gmra.mrb[0].mxu0 %v1892
        %v1996 = vpop.f32.mrb[0].mxu0
        %v1997 = vadd.f32 0.0, %v1996
        %v1998 = vpop.f32.mrb[0].mxu0
        %v1999 = vpop.f32.mrb[0].mxu0
        %v2000 = vpop.f32.mrb[0].mxu0
        %2001 = vmatprep.mubr.bf16.mxu0 0
        %2002 = vmatmul.mubr.bf16.gmra.mrb[0].mxu0 %v1895
        %v2003 = vpop.f32.mrb[0].mxu0
        %v2004 = vadd.f32 0.0, %v2003
        %v2005 = vpop.f32.mrb[0].mxu0
        %v2006 = vpop.f32.mrb[0].mxu0
        %v2007 = vadd.f32 0.0, %v2006
        %v2008 = vpop.f32.mrb[0].mxu0
        %2009 = vmatprep.mubr.bf16.mxu0 0
        %2010 = vmatmul.mubr.bf16.gmra.mrb[0].mxu0 %v1898
        %v2011 = vpop.f32.mrb[0].mxu0
        %v2012 = vpop.f32.mrb[0].mxu0
        %v2013 = vpop.f32.mrb[0].mxu0
        %v2014 = vadd.f32 0.0, %v2013
        %v2015 = vpop.f32.mrb[0].mxu0
        %2016 = vmatprep.mubr.bf16.mxu0 0
        %2017 = vmatmul.mubr.bf16.gmra.mrb[0].mxu0 %v1901
        %v2018 = vpop.f32.mrb[0].mxu0
        %v2019 = vadd.f32 0.0, %v2018
        %v2020 = vpop.f32.mrb[0].mxu0
        %v2021 = vpop.f32.mrb[0].mxu0
        %v2022 = vpop.f32.mrb[0].mxu0
        %2023 = vdwg.mxu0
        %v2024 = vadd.f32 %v1829, %v1938
        %v2025 = vadd.f32 %v1830, %v1941
        %v2026 = vadd.f32 %v1831, %v1948
        %v2027 = vadd.f32 %v1832, %v1953
        %v2028 = vadd.f32 %v1833, %v1960
        %v2029 = vadd.f32 %v1834, %v1963
        %v2030 = vadd.f32 %v1835, %v1970
        %v2031 = vadd.f32 %v1836, %v1975
        %v2032 = vadd.f32 %v1837, %v1982
        %v2033 = vadd.f32 %v1838, %v1985
        %v2034 = vadd.f32 %v1839, %v1992
        %v2035 = vadd.f32 %v1840, %v1997
        %v2036 = vadd.f32 %v1841, %v2004
        %v2037 = vadd.f32 %v1842, %v2007
        %v2038 = vadd.f32 %v1843, %v2014
        %v2039 = vadd.f32 %v1844, %v2019
        %s2040 = scalar_lea.vmem %s1, 128
        %v2041 = vld [vmem:[%s2040] sm:$0xf]
        %v2042 = vld [vmem:[%s2040 + $0x4] sm:$0xf]
        %v2043 = vld [vmem:[%s2040 + $0x8] sm:$0xf]
        %v2044 = vld [vmem:[%s2040 + $0xc] sm:$0xf]
        %v2045 = vrot.slane %v1684, 1
        %v2046 = vsel %vm762, %v784, %v2045
        %v2047 = vrot.slane %v1685, 1
        %v2048 = vsel %vm762, %v2045, %v2047
        %v2049 = vrot.slane %v1686, 1
        %v2050 = vsel %vm762, %v2047, %v2049
        %v2051 = vrot.slane %v1852, 1
        %v2052 = vsel %vm762, %v2049, %v2051
        %v2057 = vunpack.c.l.b16 %v2041
        %v2058 = vunpack.c.l.b16 %v2042
        %v2059 = vunpack.c.l.b16 %v2043
        %v2060 = vunpack.c.l.b16 %v2044
        %v2061 = vpack.c.b16 %v2058, %v2057
        %v2062 = vpack.c.b16 %v2060, %v2059
        %v2066 = vsel %vm442, %v2046, 0
        %v2069 = vsel %vm442, %v2048, 0
        %v2072 = vsel %vm442, %v2050, 0
        %v2075 = vsel %vm442, %v2052, 0
        %2077 = vmatprep.subr.bf16.mxu0 0
        %2078 = vmatpush1.bf16.msra.mxu0 %v2061
        %2079 = vmatprep.subr.bf16.mxu0 0
        %2080 = vmatpush1.bf16.msra.mxu0 %v2062
        %2081 = vmatprep.subr.bf16.mxu0 0
        %2082 = vmatpush1.bf16.msra.mxu0 0
        %2083 = vmatprep.subr.bf16.mxu0 0
        %2084 = vmatpush1.bf16.msra.mxu0 0
        %2085 = vmatprep.subr.bf16.mxu0 0
        %2086 = vmatpush1.bf16.msra.mxu0 0
        %2087 = vmatprep.subr.bf16.mxu0 0
        %2088 = vmatpush1.bf16.msra.mxu0 0
        %2089 = vmatprep.subr.bf16.mxu0 0
        %2090 = vmatpush1.bf16.msra.mxu0 0
        %2091 = vmatprep.subr.bf16.mxu0 0
        %2092 = vmatpush1.bf16.msra.mxu0 0
        %2093 = vmatprep.subr.bf16.mxu0 0
        %2094 = vmatpush1.bf16.msra.mxu0 0
        %2095 = vmatprep.subr.bf16.mxu0 0
        %2096 = vmatpush1.bf16.msra.mxu0 0
        %2097 = vmatprep.subr.bf16.mxu0 0
        %2098 = vmatpush1.bf16.msra.mxu0 0
        %2099 = vmatprep.subr.bf16.mxu0 0
        %2100 = vmatpush1.bf16.msra.mxu0 0
        %2101 = vmatprep.subr.bf16.mxu0 0
        %2102 = vmatpush1.bf16.msra.mxu0 0
        %2103 = vmatprep.subr.bf16.mxu0 0
        %2104 = vmatpush1.bf16.msra.mxu0 0
        %2105 = vmatprep.subr.bf16.mxu0 0
        %2106 = vmatpush1.bf16.msra.mxu0 0
        %2107 = vmatprep.subr.bf16.mxu0 0
        %2108 = vmatpush1.bf16.msra.mxu0 0
        %2109 = vmatprep.mubr.bf16.mxu0 0
        %2110 = vmatmul.mubr.bf16.gmra.mrb[0].mxu0 %v810
        %v2111 = vpop.f32.mrb[0].mxu0
        %v2112 = vadd.f32 0.0, %v2111
        %v2113 = vpop.f32.mrb[0].mxu0
        %v2114 = vpop.f32.mrb[0].mxu0
        %v2115 = vadd.f32 0.0, %v2114
        %v2116 = vpop.f32.mrb[0].mxu0
        %2117 = vmatprep.mubr.bf16.mxu0 0
        %2118 = vmatmul.mubr.bf16.gmra.mrb[0].mxu0 %v813
        %v2119 = vpop.f32.mrb[0].mxu0
        %v2120 = vpop.f32.mrb[0].mxu0
        %v2121 = vpop.f32.mrb[0].mxu0
        %v2122 = vadd.f32 0.0, %v2121
        %v2123 = vpop.f32.mrb[0].mxu0
        %2124 = vmatprep.mubr.bf16.mxu0 0
        %2125 = vmatmul.mubr.bf16.gmra.mrb[0].mxu0 %v816
        %v2126 = vpop.f32.mrb[0].mxu0
        %v2127 = vadd.f32 0.0, %v2126
        %v2128 = vpop.f32.mrb[0].mxu0
        %v2129 = vpop.f32.mrb[0].mxu0
        %v2130 = vpop.f32.mrb[0].mxu0
        %2131 = vmatprep.mubr.bf16.mxu0 0
        %2132 = vmatmul.mubr.bf16.gmra.mrb[0].mxu0 %v819
        %v2133 = vpop.f32.mrb[0].mxu0
        %v2134 = vadd.f32 0.0, %v2133
        %v2135 = vpop.f32.mrb[0].mxu0
        %v2136 = vpop.f32.mrb[0].mxu0
        %v2137 = vadd.f32 0.0, %v2136
        %v2138 = vpop.f32.mrb[0].mxu0
        %2139 = vmatprep.mubr.bf16.mxu0 0
        %2140 = vmatmul.mubr.bf16.gmra.mrb[0].mxu0 %v822
        %v2141 = vpop.f32.mrb[0].mxu0
        %v2142 = vpop.f32.mrb[0].mxu0
        %v2143 = vpop.f32.mrb[0].mxu0
        %v2144 = vadd.f32 0.0, %v2143
        %v2145 = vpop.f32.mrb[0].mxu0
        %2146 = vmatprep.mubr.bf16.mxu0 0
        %2147 = vmatmul.mubr.bf16.gmra.mrb[0].mxu0 %v825
        %v2148 = vpop.f32.mrb[0].mxu0
        %v2149 = vadd.f32 0.0, %v2148
        %v2150 = vpop.f32.mrb[0].mxu0
        %v2151 = vpop.f32.mrb[0].mxu0
        %v2152 = vpop.f32.mrb[0].mxu0
        %2153 = vmatprep.mubr.bf16.mxu0 0
        %2154 = vmatmul.mubr.bf16.gmra.mrb[0].mxu0 %v828
        %v2155 = vpop.f32.mrb[0].mxu0
        %v2156 = vadd.f32 0.0, %v2155
        %v2157 = vpop.f32.mrb[0].mxu0
        %v2158 = vpop.f32.mrb[0].mxu0
        %v2159 = vadd.f32 0.0, %v2158
        %v2160 = vpop.f32.mrb[0].mxu0
        %2161 = vmatprep.mubr.bf16.mxu0 0
        %2162 = vmatmul.mubr.bf16.gmra.mrb[0].mxu0 %v831
        %v2163 = vpop.f32.mrb[0].mxu0
        %v2164 = vpop.f32.mrb[0].mxu0
        %v2165 = vpop.f32.mrb[0].mxu0
        %v2166 = vadd.f32 0.0, %v2165
        %v2167 = vpop.f32.mrb[0].mxu0
        %2168 = vmatprep.mubr.bf16.mxu0 0
        %2169 = vmatmul.mubr.bf16.gmra.mrb[0].mxu0 %v2066
        %v2170 = vpop.f32.mrb[0].mxu0
        %v2171 = vadd.f32 0.0, %v2170
        %v2172 = vpop.f32.mrb[0].mxu0
        %v2173 = vpop.f32.mrb[0].mxu0
        %v2174 = vpop.f32.mrb[0].mxu0
        %2175 = vmatprep.mubr.bf16.mxu0 0
        %2176 = vmatmul.mubr.bf16.gmra.mrb[0].mxu0 %v2069
        %v2177 = vpop.f32.mrb[0].mxu0
        %v2178 = vadd.f32 0.0, %v2177
        %v2179 = vpop.f32.mrb[0].mxu0
        %v2180 = vpop.f32.mrb[0].mxu0
        %v2181 = vadd.f32 0.0, %v2180
        %v2182 = vpop.f32.mrb[0].mxu0
        %2183 = vmatprep.mubr.bf16.mxu0 0
        %2184 = vmatmul.mubr.bf16.gmra.mrb[0].mxu0 %v2072
        %v2185 = vpop.f32.mrb[0].mxu0
        %v2186 = vpop.f32.mrb[0].mxu0
        %v2187 = vpop.f32.mrb[0].mxu0
        %v2188 = vadd.f32 0.0, %v2187
        %v2189 = vpop.f32.mrb[0].mxu0
        %2190 = vmatprep.mubr.bf16.mxu0 0
        %2191 = vmatmul.mubr.bf16.gmra.mrb[0].mxu0 %v2075
        %v2192 = vpop.f32.mrb[0].mxu0
        %v2193 = vadd.f32 0.0, %v2192
        %v2194 = vpop.f32.mrb[0].mxu0
        %v2195 = vpop.f32.mrb[0].mxu0
        %v2196 = vpop.f32.mrb[0].mxu0
        %2197 = vdwg.mxu0
        %v2198 = vadd.f32 %v2024, %v2112
        %v2199 = vadd.f32 %v2025, %v2115
        %v2200 = vadd.f32 %v2026, %v2122
        %v2201 = vadd.f32 %v2027, %v2127
        %v2202 = vadd.f32 %v2028, %v2134
        %v2203 = vadd.f32 %v2029, %v2137
        %v2204 = vadd.f32 %v2030, %v2144
        %v2205 = vadd.f32 %v2031, %v2149
        %v2206 = vadd.f32 %v2032, %v2156
        %v2207 = vadd.f32 %v2033, %v2159
        %v2208 = vadd.f32 %v2034, %v2166
        %v2209 = vadd.f32 %v2035, %v2171
        %v2210 = vadd.f32 %v2036, %v2178
        %v2211 = vadd.f32 %v2037, %v2181
        %v2212 = vadd.f32 %v2038, %v2188
        %v2213 = vadd.f32 %v2039, %v2193
        %v2214 = vld [vmem:[%s2] sm:$0x1]
        %v2216 = vlaneseq
        %v2217 = vshrl.u32 %v2216, 7
        %v2218 = vsub.s32 0, %v2217
        %v2219 = vrot.slane %v2214, %v2218
        %v2221 = vmul.f32 %v2198, %v2219
        %v2222 = vmul.f32 %v2199, %v2219
        %v2223 = vmul.f32 %v2200, %v2219
        %v2224 = vmul.f32 %v2201, %v2219
        %v2225 = vmul.f32 %v2202, %v2219
        %v2226 = vmul.f32 %v2203, %v2219
        %v2227 = vmul.f32 %v2204, %v2219
        %v2228 = vmul.f32 %v2205, %v2219
        %v2229 = vmul.f32 %v2206, %v2219
        %v2230 = vmul.f32 %v2207, %v2219
        %v2231 = vmul.f32 %v2208, %v2219
        %v2232 = vmul.f32 %v2209, %v2219
        %v2233 = vmul.f32 %v2210, %v2219
        %v2234 = vmul.f32 %v2211, %v2219
        %v2235 = vmul.f32 %v2212, %v2219
        %v2236 = vmul.f32 %v2213, %v2219
        %v2237 = vld [vmem:[%s3] sm:$0x1]
        %v2239 = vlaneseq
        %v2240 = vshrl.u32 %v2239, 7
        %v2241 = vsub.s32 0, %v2240
        %v2242 = vrot.slane %v2237, %v2241
        %v2244 = vadd.f32 %v2221, %v2242
        %v2245 = vadd.f32 %v2222, %v2242
        %v2246 = vadd.f32 %v2223, %v2242
        %v2247 = vadd.f32 %v2224, %v2242
        %v2248 = vadd.f32 %v2225, %v2242
        %v2249 = vadd.f32 %v2226, %v2242
        %v2250 = vadd.f32 %v2227, %v2242
        %v2251 = vadd.f32 %v2228, %v2242
        %v2252 = vadd.f32 %v2229, %v2242
        %v2253 = vadd.f32 %v2230, %v2242
        %v2254 = vadd.f32 %v2231, %v2242
        %v2255 = vadd.f32 %v2232, %v2242
        %v2256 = vadd.f32 %v2233, %v2242
        %v2257 = vadd.f32 %v2234, %v2242
        %v2258 = vadd.f32 %v2235, %v2242
        %v2259 = vadd.f32 %v2236, %v2242
        %v2260 = vmax.f32 %v2244, 0.0
        %v2261 = vmax.f32 %v2245, 0.0
        %v2262 = vmax.f32 %v2246, 0.0
        %v2263 = vmax.f32 %v2247, 0.0
        %v2264 = vmax.f32 %v2248, 0.0
        %v2265 = vmax.f32 %v2249, 0.0
        %v2266 = vmax.f32 %v2250, 0.0
        %v2267 = vmax.f32 %v2251, 0.0
        %v2268 = vmax.f32 %v2252, 0.0
        %v2269 = vmax.f32 %v2253, 0.0
        %v2270 = vmax.f32 %v2254, 0.0
        %v2271 = vmax.f32 %v2255, 0.0
        %v2272 = vmax.f32 %v2256, 0.0
        %v2273 = vmax.f32 %v2257, 0.0
        %v2274 = vmax.f32 %v2258, 0.0
        %v2275 = vmax.f32 %v2259, 0.0
        %v2276 = vmin.f32 %v2260, 6.0
        %v2277 = vmin.f32 %v2261, 6.0
        %v2278 = vmin.f32 %v2262, 6.0
        %v2279 = vmin.f32 %v2263, 6.0
        %v2280 = vmin.f32 %v2264, 6.0
        %v2281 = vmin.f32 %v2265, 6.0
        %v2282 = vmin.f32 %v2266, 6.0
        %v2283 = vmin.f32 %v2267, 6.0
        %v2284 = vmin.f32 %v2268, 6.0
        %v2285 = vmin.f32 %v2269, 6.0
        %v2286 = vmin.f32 %v2270, 6.0
        %v2287 = vmin.f32 %v2271, 6.0
        %v2288 = vmin.f32 %v2272, 6.0
        %v2289 = vmin.f32 %v2273, 6.0
        %v2290 = vmin.f32 %v2274, 6.0
        %v2291 = vmin.f32 %v2275, 6.0
        %vm2292 = vcmask 523264
        %2293 = vst.msk [vmem:[%s214] sm:$0xff] %vm2292, %v2276
        %2294 = vst.msk [vmem:[%s214 + $0x8] sm:$0xff] %vm2292, %v2277
        %2295 = vst.msk [vmem:[%s214 + $0x10] sm:$0xff] %vm2292, %v2278
        %2296 = vst.msk [vmem:[%s214 + $0x18] sm:$0xff] %vm2292, %v2279
        %2297 = vst.msk [vmem:[%s214 + $0x20] sm:$0xff] %vm2292, %v2280
        %2298 = vst.msk [vmem:[%s214 + $0x28] sm:$0xff] %vm2292, %v2281
        %2299 = vst.msk [vmem:[%s214 + $0x30] sm:$0xff] %vm2292, %v2282
        %2300 = vst.msk [vmem:[%s214 + $0x38] sm:$0xff] %vm2292, %v2283
        %2301 = vst.msk [vmem:[%s214 + $0x40] sm:$0xff] %vm2292, %v2284
        %2302 = vst.msk [vmem:[%s214 + $0x48] sm:$0xff] %vm2292, %v2285
        %2303 = vst.msk [vmem:[%s214 + $0x50] sm:$0xff] %vm2292, %v2286
        %2304 = vst.msk [vmem:[%s214 + $0x58] sm:$0xff] %vm2292, %v2287
        %2305 = vst.msk [vmem:[%s214 + $0x60] sm:$0xff] %vm2292, %v2288
        %2306 = vst.msk [vmem:[%s214 + $0x68] sm:$0xff] %vm2292, %v2289
        %2307 = vst.msk [vmem:[%s214 + $0x70] sm:$0xff] %vm2292, %v2290
        %2308 = vst.msk [vmem:[%s214 + $0x78] sm:$0xff] %vm2292, %v2291
        %s2309 = sand.u32 %s131, 1
        %s2310 = scalar_lea.sflag [#allocation3], %s2309
        %s2311 = sand.u32 %s131, 1
        %s2312 = smul.addr %s2311, 128
        %s2313 = scalar_lea.vmem [#allocation2], %s2312
        // Predicated region
        $region37: #{conv_bn_relu6.1} parent=35 // pred_check
          %p2314 = pneg %p141
        $region38: #{conv_bn_relu6.1} parent=35 // pred_check_branch
          %2316 = sbr.rel (%p2314) target = $region40
        $region39: #{conv_bn_relu6.1} parent=35 // pred_region
          %s2317 = smul.u32 8, %s23
          %s2319 = ssub.s32 2048, 2048
          %2320 = vsyncadd %s2310, %s2319
          %s2321 = smul.addr %s2317, 2
          %s2322 = smul.addr %s22, 32
          %s2323 = sadd.s32 %s2321, %s2322
          %s2324 = smul.addr %s2323, 128
          %s2325 = scalar_lea.hbm %s4, %s2324
          %s2326 = sshll.u32 %s2313, 4
          %s2327 = int_to_ptr.vmem [resolvable:$true] %s2326
          %2332 = dma.vmem_to_hbm [thread:$0]  %s2327, 2048, %s2325, %s2310, 128, 128, 8
        $region40: #{conv_bn_relu6.1} parent=35 // pred_fallthru
          _
      $region36: #{conv_bn_relu6.1} parent=5 // pred_fallthru
        _
      %p2333 = scmp.le.s32.totalorder 2, %s13
      // Predicated region
      $region41: #{conv_bn_relu6.1} parent=5 // pred_check
        %p2334 = pneg %p2333
      $region42: #{conv_bn_relu6.1} parent=5 // pred_check_branch
        %2336 = sbr.rel (%p2334) target = $region44
      $region43: #{conv_bn_relu6.1} parent=5 // pred_region
        %s2337 = ssub.s32 %s13, 2
        // Predicated region
        $region45: #{conv_bn_relu6.1} parent=43 // pred_check
          %p2338 = pneg %p147
        $region46: #{conv_bn_relu6.1} parent=43 // pred_check_branch
          %2340 = sbr.rel (%p2338) target = $region48
        $region47: #{conv_bn_relu6.1} parent=43 // pred_region
          %s2341 = sand.u32 %s132, 1
          %s2342 = scalar_lea.sflag [#allocation3], %s2341
          %s2343 = sand.u32 %s132, 1
          %s2344 = smul.addr %s2343, 128
          %s2345 = scalar_lea.vmem [#allocation2], %s2344
          %2346 = dma.done %s2342, 2048
        $region48: #{conv_bn_relu6.1} parent=43 // pred_fallthru
          _
      $region44: #{conv_bn_relu6.1} parent=5 // pred_fallthru
        _
    $region6: #{conv_bn_relu6.1} parent=1 // loop_footer
      %s17 = sadd.s32 1, %s13
    $region7: #{conv_bn_relu6.1} parent=1 // loop_footer_branch
      %12 = sbr.rel target = $region3
    $region8: #{conv_bn_relu6.1} parent=1 // loop_exit
      _
    %2347 = vsyncpa [#allocation3], 1
    %s2348 = scalar_lea.sflag [#allocation3], 1
    %2349 = vsyncpa %s2348, 1

</llo_original>
